<compile_context>
chip_gen: v7x
topology: tpu7x:2x2x1
jax: 0.10.0
libtpu: 0.0.40
codegen_flags: <defaults>
</compile_context>

<pallas_src>
import math

import jax
import jax.numpy as jnp
from jax.experimental import pallas as pl
from jax.experimental.pallas import tpu as pltpu  # noqa: F401  (TPU backend)


def _glstm_kernel(x_ref, a_ref, h0_ref, c0_ref,
                  wx_ifg_ref, wx_o_ref, wh_ref, b_ref, wcol_ref,
                  out_ref):
    f32 = jnp.float32
    seq_len, br, _ = x_ref.shape
    hdim = wcol_ref.shape[-1]

    # Hoist weight loads / constants out of the time loop (JAX does not CSE
    # broadcast_in_dim, so re-reading per iteration would be re-emitted).
    wx_ifg = wx_ifg_ref[...]          # (P, 4H)
    wx_o = wx_o_ref[...]              # (P, 4H)  nonzero only in o-gate lanes
    wh_all = wh_ref[...]              # (H, 4H)
    b_all = b_ref[...]                # (1, 4H)
    wcol = wcol_ref[...]              # (1, H)

    lane = jax.lax.broadcasted_iota(jnp.int32, (br, 4 * hdim), 1)
    is_g = jnp.logical_and(lane >= 2 * hdim, lane < 3 * hdim)

    def step(t, carry):
        h, c = carry
        x_t = x_ref[t]                # (B*R, P)
        a_t = a_ref[t]                # (B*R, B*R) block-diagonal adjacency

        # o-gate x path:  (a @ x) @ (Wn @ Wio)  ==  a @ (x @ (Wn @ Wio))
        xo = jnp.dot(x_t, wx_o, preferred_element_type=f32)        # (B*R, 4H)
        pre = (jnp.dot(x_t, wx_ifg, preferred_element_type=f32)
               + jnp.dot(a_t, xo, preferred_element_type=f32)
               + jnp.dot(h, wh_all, preferred_element_type=f32)
               + b_all)                                            # (B*R, 4H)

        # One EUP pass each for tanh / sigmoid over the fused tile.
        act = jnp.where(is_g, jnp.tanh(pre), jax.nn.sigmoid(pre))

        # diag_embed(gate @ W) @ M  ==  (sum_h gate*W)[..., None] * M
        i_s = jnp.sum(act[:, 0:hdim] * wcol, axis=-1, keepdims=True)
        f_s = jnp.sum(act[:, hdim:2 * hdim] * wcol, axis=-1, keepdims=True)
        g_t = act[:, 2 * hdim:3 * hdim]
        o_s = jnp.sum(act[:, 3 * hdim:4 * hdim] * wcol, axis=-1, keepdims=True)

        c_new = f_s * c + i_s * g_t
        h_new = o_s * jnp.tanh(c_new)
        out_ref[t] = h_new.astype(out_ref.dtype)
        return h_new, c_new

    jax.lax.fori_loop(0, seq_len, step, (h0_ref[...], c0_ref[...]),
                      unroll=True)


def glstm_forward(x0, a, h0, c0, params):
    seq_len, batch, R, P = x0.shape
    H = h0.shape[-1]
    BR = batch * R

    # ---- wrapper-side flattening / weight fusion (done once, cheap) ----
    x_flat = x0.reshape(seq_len, BR, P)
    h0_flat = h0.reshape(BR, H)
    c0_flat = c0.reshape(BR, H)

    # block-diagonal adjacency: (seq, B, R, R) -> (seq, B*R, B*R)
    eye_b = jnp.eye(batch, dtype=a.dtype)
    a_blk = jnp.einsum('sbij,bc->sbicj', a, eye_b).reshape(seq_len, BR, BR)

    zeros_ph = jnp.zeros((P, H), jnp.float32)
    wx_ifg = jnp.concatenate(
        [params['Wii'], params['Wif'], params['Wig'], zeros_ph], axis=1)
    w_no = params['Wn'] @ params['Wio']                     # fold Wn into o gate
    wx_o = jnp.concatenate([zeros_ph, zeros_ph, zeros_ph, w_no], axis=1)
    wh_all = jnp.concatenate(
        [params['Whi'], params['Whf'], params['Whg'], params['Who']], axis=1)
    b_o = params['bn'] @ params['Wio'] + params['bo']       # (1, H)
    b_all = jnp.concatenate(
        [params['bi'], params['bf'], params['bg'], b_o], axis=1)   # (1, 4H)

    out = pl.pallas_call(
        _glstm_kernel,
        out_shape=jax.ShapeDtypeStruct((seq_len, BR, H), jnp.float32),
    )(x_flat, a_blk, h0_flat, c0_flat,
      wx_ifg, wx_o, wh_all, b_all, params['Wcol'])

    return out.reshape(seq_len, batch, R * H)


def glstm_reference(x0, a, h0, c0, params):
    """Pure-JAX reference mirroring the PyTorch forward (unfused)."""
    seq_len = x0.shape[0]
    h, c = h0, c0
    wcol = params['Wcol'][0][:, None]        # (H, 1)
    outs = []
    for t in range(seq_len):
        x_t, a_t = x0[t], a[t]
        ax_t = jnp.einsum('brk,bkp->brp', a_t, x_t) @ params['Wn'] + params['bn'][0]

        def gate(xin, wx, wh, b):
            return xin @ wx + h @ wh + b[0]

        i_s = jax.nn.sigmoid(gate(x_t, params['Wii'], params['Whi'], params['bi'])) @ wcol
        f_s = jax.nn.sigmoid(gate(x_t, params['Wif'], params['Whf'], params['bf'])) @ wcol
        g_t = jnp.tanh(gate(x_t, params['Wig'], params['Whg'], params['bg']))
        o_s = jax.nn.sigmoid(gate(ax_t, params['Wio'], params['Who'], params['bo'])) @ wcol
        c = f_s * c + i_s * g_t
        h = o_s * jnp.tanh(c)
        outs.append(h)
    return jnp.stack(outs, 0).reshape(seq_len, x0.shape[1], -1)


def init_params(key, p, hidden):
    """Deterministic uniform(-stdv, stdv) init matching the torch module."""
    stdv = 1.0 / math.sqrt(hidden)
    ks = jax.random.split(key, 20)

    def u(k, shape):
        return jax.random.uniform(k, shape, jnp.float32, -stdv, stdv)

    return {
        'Wn':  u(ks[0], (p, p)),
        'bn':  u(ks[1], (1, p)),
        'Wii': u(ks[2], (p, hidden)),
        'Whi': u(ks[3], (hidden, hidden)),
        'bi':  u(ks[4], (1, hidden)) + u(ks[5], (1, hidden)),    # b_ii + b_hi
        'Wif': u(ks[6], (p, hidden)),
        'Whf': u(ks[7], (hidden, hidden)),
        'bf':  u(ks[8], (1, hidden)) + u(ks[9], (1, hidden)),    # b_if + b_hf
        'Wig': u(ks[10], (p, hidden)),
        'Whg': u(ks[11], (hidden, hidden)),
        'bg':  u(ks[12], (1, hidden)) + u(ks[13], (1, hidden)),  # b_ig + b_hg
        'Wio': u(ks[14], (p, hidden)),
        'Who': u(ks[15], (hidden, hidden)),
        'bo':  u(ks[16], (1, hidden)) + u(ks[17], (1, hidden)),  # b_io + b_ho
        'Wcol': u(ks[18], (1, hidden)),                          # W (hidden,1), stored transposed
    }


if __name__ == "__main__":
    seq_len, batch, data_row, p, hidden = 4, 2, 8, 8, 32

    key = jax.random.PRNGKey(0)
    k_x, k_a, k_h, k_c, k_p = jax.random.split(key, 5)

    x0 = jax.random.normal(k_x, (seq_len, batch, data_row, p), jnp.float32)
    a = jax.random.normal(k_a, (seq_len, batch, data_row, data_row), jnp.float32)
    # torch.randn(h0/c0) in the reference forward -> deterministic normals here
    h0 = jax.random.normal(k_h, (batch, data_row, hidden), jnp.float32)
    c0 = jax.random.normal(k_c, (batch, data_row, hidden), jnp.float32)

    params = init_params(k_p, p, hidden)

    fwd = jax.jit(glstm_forward)
    out = jax.block_until_ready(fwd(x0, a, h0, c0, params))

    ref = glstm_reference(x0, a, h0, c0, params)
    assert out.shape == (seq_len, batch, data_row * hidden)
    assert jnp.allclose(out, ref, rtol=1e-4, atol=1e-4), "mismatch vs reference"

    print("KERNEL_OK")
</pallas_src>

<mosaic_0001>
module attributes {stable_mosaic.version = 11 : i64} {
  func.func @_glstm_kernel(%arg0: memref<4x16x8xf32, #tpu.memory_space<vmem>>, %arg1: memref<4x16x16xf32, #tpu.memory_space<vmem>>, %arg2: memref<16x32xf32, #tpu.memory_space<vmem>>, %arg3: memref<16x32xf32, #tpu.memory_space<vmem>>, %arg4: memref<8x128xf32, #tpu.memory_space<vmem>>, %arg5: memref<8x128xf32, #tpu.memory_space<vmem>>, %arg6: memref<32x128xf32, #tpu.memory_space<vmem>>, %arg7: memref<1x128xf32, #tpu.memory_space<vmem>>, %arg8: memref<1x32xf32, #tpu.memory_space<vmem>>, %arg9: memref<4x16x32xf32, #tpu.memory_space<vmem>>) attributes {dimension_semantics = [], scalar_prefetch = 0 : i64, scratch_operands = 0 : i64, tpu.core_type = #tpu.core_type<tc>} {
    %c0 = arith.constant 0 : index
    %c0_0 = arith.constant 0 : index
    %0 = vector.load %arg4[%c0, %c0_0] : memref<8x128xf32, #tpu.memory_space<vmem>>, vector<8x128xf32>
    %c0_1 = arith.constant 0 : index
    %c0_2 = arith.constant 0 : index
    %1 = vector.load %arg5[%c0_1, %c0_2] : memref<8x128xf32, #tpu.memory_space<vmem>>, vector<8x128xf32>
    %c0_3 = arith.constant 0 : index
    %c0_4 = arith.constant 0 : index
    %2 = vector.load %arg6[%c0_3, %c0_4] : memref<32x128xf32, #tpu.memory_space<vmem>>, vector<32x128xf32>
    %c0_5 = arith.constant 0 : index
    %c0_6 = arith.constant 0 : index
    %3 = vector.load %arg7[%c0_5, %c0_6] : memref<1x128xf32, #tpu.memory_space<vmem>>, vector<1x128xf32>
    %c0_7 = arith.constant 0 : index
    %c0_8 = arith.constant 0 : index
    %4 = vector.load %arg8[%c0_7, %c0_8] : memref<1x32xf32, #tpu.memory_space<vmem>>, vector<1x32xf32>
    %5 = tpu.iota {dimensions = array<i32: 1>} : vector<16x128xi32>
    %c64_i32 = arith.constant 64 : i32
    %6 = vector.broadcast %c64_i32 : i32 to vector<16x128xi32>
    %7 = arith.cmpi sge, %5, %6 : vector<16x128xi32>
    %c96_i32 = arith.constant 96 : i32
    %8 = vector.broadcast %c96_i32 : i32 to vector<16x128xi32>
    %9 = arith.cmpi slt, %5, %8 : vector<16x128xi32>
    %10 = arith.andi %7, %9 : vector<16x128xi1>
    %c0_9 = arith.constant 0 : index
    %c0_10 = arith.constant 0 : index
    %11 = vector.load %arg2[%c0_9, %c0_10] : memref<16x32xf32, #tpu.memory_space<vmem>>, vector<16x32xf32>
    %c0_11 = arith.constant 0 : index
    %c0_12 = arith.constant 0 : index
    %12 = vector.load %arg3[%c0_11, %c0_12] : memref<16x32xf32, #tpu.memory_space<vmem>>, vector<16x32xf32>
    %c0_i32 = arith.constant 0 : i32
    %13 = arith.index_cast %c0_i32 : i32 to index
    %c0_13 = arith.constant 0 : index
    %c0_14 = arith.constant 0 : index
    %14 = vector.load %arg0[%13, %c0_13, %c0_14] : memref<4x16x8xf32, #tpu.memory_space<vmem>>, vector<1x16x8xf32>
    %15 = vector.shape_cast %14 : vector<1x16x8xf32> to vector<16x8xf32>
    %16 = arith.index_cast %c0_i32 : i32 to index
    %c0_15 = arith.constant 0 : index
    %c0_16 = arith.constant 0 : index
    %17 = vector.load %arg1[%16, %c0_15, %c0_16] : memref<4x16x16xf32, #tpu.memory_space<vmem>>, vector<1x16x16xf32>
    %18 = vector.shape_cast %17 : vector<1x16x16xf32> to vector<16x16xf32>
    %cst = arith.constant dense<0.000000e+00> : vector<16x128xf32>
    %19 = tpu.matmul %15, %1, %cst {dimension_numbers = #tpu.dot_dimension_numbers<[1], [0], [0], [1], [0, 0, 1, 1], [], []>} : vector<16x8xf32>, vector<8x128xf32>, vector<16x128xf32> -> vector<16x128xf32>
    %cst_17 = arith.constant dense<0.000000e+00> : vector<16x128xf32>
    %20 = tpu.matmul %15, %0, %cst_17 {dimension_numbers = #tpu.dot_dimension_numbers<[1], [0], [0], [1], [0, 0, 1, 1], [], []>} : vector<16x8xf32>, vector<8x128xf32>, vector<16x128xf32> -> vector<16x128xf32>
    %cst_18 = arith.constant dense<0.000000e+00> : vector<16x128xf32>
    %21 = tpu.matmul %18, %19, %cst_18 {dimension_numbers = #tpu.dot_dimension_numbers<[1], [0], [0], [1], [0, 0, 1, 1], [], []>} : vector<16x16xf32>, vector<16x128xf32>, vector<16x128xf32> -> vector<16x128xf32>
    %22 = arith.addf %20, %21 : vector<16x128xf32>
    %cst_19 = arith.constant dense<0.000000e+00> : vector<16x128xf32>
    %23 = tpu.matmul %11, %2, %cst_19 {dimension_numbers = #tpu.dot_dimension_numbers<[1], [0], [0], [1], [0, 0, 1, 1], [], []>} : vector<16x32xf32>, vector<32x128xf32>, vector<16x128xf32> -> vector<16x128xf32>
    %24 = arith.addf %22, %23 : vector<16x128xf32>
    %25 = vector.broadcast %3 : vector<1x128xf32> to vector<16x128xf32>
    %26 = arith.addf %24, %25 : vector<16x128xf32>
    %27 = math.tanh %26 : vector<16x128xf32>
    %28 = arith.negf %26 : vector<16x128xf32>
    %29 = math.exp %28 : vector<16x128xf32>
    %cst_20 = arith.constant 1.000000e+00 : f32
    %30 = vector.broadcast %cst_20 : f32 to vector<16x128xf32>
    %31 = arith.addf %30, %29 : vector<16x128xf32>
    %32 = arith.divf %30, %31 : vector<16x128xf32>
    %33 = arith.select %10, %27, %32 : vector<16x128xi1>, vector<16x128xf32>
    %34 = vector.extract_strided_slice %33 {offsets = [0, 0], sizes = [16, 32], strides = [1, 1]} : vector<16x128xf32> to vector<16x32xf32>
    %35 = vector.broadcast %4 : vector<1x32xf32> to vector<16x32xf32>
    %36 = arith.mulf %34, %35 : vector<16x32xf32>
    %cst_21 = arith.constant dense<0.000000e+00> : vector<16xf32>
    %37 = vector.multi_reduction <add>, %36, %cst_21 [1] : vector<16x32xf32> to vector<16xf32>
    %38 = vector.shape_cast %37 : vector<16xf32> to vector<16x1xf32>
    %39 = vector.extract_strided_slice %33 {offsets = [0, 32], sizes = [16, 32], strides = [1, 1]} : vector<16x128xf32> to vector<16x32xf32>
    %40 = vector.broadcast %4 : vector<1x32xf32> to vector<16x32xf32>
    %41 = arith.mulf %39, %40 : vector<16x32xf32>
    %cst_22 = arith.constant dense<0.000000e+00> : vector<16xf32>
    %42 = vector.multi_reduction <add>, %41, %cst_22 [1] : vector<16x32xf32> to vector<16xf32>
    %43 = vector.shape_cast %42 : vector<16xf32> to vector<16x1xf32>
    %44 = vector.extract_strided_slice %33 {offsets = [0, 64], sizes = [16, 32], strides = [1, 1]} : vector<16x128xf32> to vector<16x32xf32>
    %45 = vector.extract_strided_slice %33 {offsets = [0, 96], sizes = [16, 32], strides = [1, 1]} : vector<16x128xf32> to vector<16x32xf32>
    %46 = vector.broadcast %4 : vector<1x32xf32> to vector<16x32xf32>
    %47 = arith.mulf %45, %46 : vector<16x32xf32>
    %cst_23 = arith.constant dense<0.000000e+00> : vector<16xf32>
    %48 = vector.multi_reduction <add>, %47, %cst_23 [1] : vector<16x32xf32> to vector<16xf32>
    %49 = vector.shape_cast %48 : vector<16xf32> to vector<16x1xf32>
    %50 = vector.broadcast %43 : vector<16x1xf32> to vector<16x32xf32>
    %51 = arith.mulf %50, %12 : vector<16x32xf32>
    %52 = vector.broadcast %38 : vector<16x1xf32> to vector<16x32xf32>
    %53 = arith.mulf %52, %44 : vector<16x32xf32>
    %54 = arith.addf %51, %53 : vector<16x32xf32>
    %55 = math.tanh %54 : vector<16x32xf32>
    %56 = vector.broadcast %49 : vector<16x1xf32> to vector<16x32xf32>
    %57 = arith.mulf %56, %55 : vector<16x32xf32>
    %58 = arith.index_cast %c0_i32 : i32 to index
    %c0_24 = arith.constant 0 : index
    %c0_25 = arith.constant 0 : index
    %59 = vector.load %arg9[%58, %c0_24, %c0_25] : memref<4x16x32xf32, #tpu.memory_space<vmem>>, vector<1x16x32xf32>
    %60 = vector.shape_cast %59 : vector<1x16x32xf32> to vector<16x32xf32>
    %61 = vector.shape_cast %57 : vector<16x32xf32> to vector<1x16x32xf32>
    tpu.vector_store %arg9[%58, %c0_24, %c0_25], %61 {strides = array<i32>} : memref<4x16x32xf32, #tpu.memory_space<vmem>>, vector<1x16x32xf32>,
    %c1_i32 = arith.constant 1 : i32
    %62 = arith.index_cast %c1_i32 : i32 to index
    %c0_26 = arith.constant 0 : index
    %c0_27 = arith.constant 0 : index
    %63 = vector.load %arg0[%62, %c0_26, %c0_27] : memref<4x16x8xf32, #tpu.memory_space<vmem>>, vector<1x16x8xf32>
    %64 = vector.shape_cast %63 : vector<1x16x8xf32> to vector<16x8xf32>
    %65 = arith.index_cast %c1_i32 : i32 to index
    %c0_28 = arith.constant 0 : index
    %c0_29 = arith.constant 0 : index
    %66 = vector.load %arg1[%65, %c0_28, %c0_29] : memref<4x16x16xf32, #tpu.memory_space<vmem>>, vector<1x16x16xf32>
    %67 = vector.shape_cast %66 : vector<1x16x16xf32> to vector<16x16xf32>
    %cst_30 = arith.constant dense<0.000000e+00> : vector<16x128xf32>
    %68 = tpu.matmul %64, %1, %cst_30 {dimension_numbers = #tpu.dot_dimension_numbers<[1], [0], [0], [1], [0, 0, 1, 1], [], []>} : vector<16x8xf32>, vector<8x128xf32>, vector<16x128xf32> -> vector<16x128xf32>
    %cst_31 = arith.constant dense<0.000000e+00> : vector<16x128xf32>
    %69 = tpu.matmul %64, %0, %cst_31 {dimension_numbers = #tpu.dot_dimension_numbers<[1], [0], [0], [1], [0, 0, 1, 1], [], []>} : vector<16x8xf32>, vector<8x128xf32>, vector<16x128xf32> -> vector<16x128xf32>
    %cst_32 = arith.constant dense<0.000000e+00> : vector<16x128xf32>
    %70 = tpu.matmul %67, %68, %cst_32 {dimension_numbers = #tpu.dot_dimension_numbers<[1], [0], [0], [1], [0, 0, 1, 1], [], []>} : vector<16x16xf32>, vector<16x128xf32>, vector<16x128xf32> -> vector<16x128xf32>
    %71 = arith.addf %69, %70 : vector<16x128xf32>
    %cst_33 = arith.constant dense<0.000000e+00> : vector<16x128xf32>
    %72 = tpu.matmul %57, %2, %cst_33 {dimension_numbers = #tpu.dot_dimension_numbers<[1], [0], [0], [1], [0, 0, 1, 1], [], []>} : vector<16x32xf32>, vector<32x128xf32>, vector<16x128xf32> -> vector<16x128xf32>
    %73 = arith.addf %71, %72 : vector<16x128xf32>
    %74 = vector.broadcast %3 : vector<1x128xf32> to vector<16x128xf32>
    %75 = arith.addf %73, %74 : vector<16x128xf32>
    %76 = math.tanh %75 : vector<16x128xf32>
    %77 = arith.negf %75 : vector<16x128xf32>
    %78 = math.exp %77 : vector<16x128xf32>
    %cst_34 = arith.constant 1.000000e+00 : f32
    %79 = vector.broadcast %cst_34 : f32 to vector<16x128xf32>
    %80 = arith.addf %79, %78 : vector<16x128xf32>
    %81 = arith.divf %79, %80 : vector<16x128xf32>
    %82 = arith.select %10, %76, %81 : vector<16x128xi1>, vector<16x128xf32>
    %83 = vector.extract_strided_slice %82 {offsets = [0, 0], sizes = [16, 32], strides = [1, 1]} : vector<16x128xf32> to vector<16x32xf32>
    %84 = vector.broadcast %4 : vector<1x32xf32> to vector<16x32xf32>
    %85 = arith.mulf %83, %84 : vector<16x32xf32>
    %cst_35 = arith.constant dense<0.000000e+00> : vector<16xf32>
    %86 = vector.multi_reduction <add>, %85, %cst_35 [1] : vector<16x32xf32> to vector<16xf32>
    %87 = vector.shape_cast %86 : vector<16xf32> to vector<16x1xf32>
    %88 = vector.extract_strided_slice %82 {offsets = [0, 32], sizes = [16, 32], strides = [1, 1]} : vector<16x128xf32> to vector<16x32xf32>
    %89 = vector.broadcast %4 : vector<1x32xf32> to vector<16x32xf32>
    %90 = arith.mulf %88, %89 : vector<16x32xf32>
    %cst_36 = arith.constant dense<0.000000e+00> : vector<16xf32>
    %91 = vector.multi_reduction <add>, %90, %cst_36 [1] : vector<16x32xf32> to vector<16xf32>
    %92 = vector.shape_cast %91 : vector<16xf32> to vector<16x1xf32>
    %93 = vector.extract_strided_slice %82 {offsets = [0, 64], sizes = [16, 32], strides = [1, 1]} : vector<16x128xf32> to vector<16x32xf32>
    %94 = vector.extract_strided_slice %82 {offsets = [0, 96], sizes = [16, 32], strides = [1, 1]} : vector<16x128xf32> to vector<16x32xf32>
    %95 = vector.broadcast %4 : vector<1x32xf32> to vector<16x32xf32>
    %96 = arith.mulf %94, %95 : vector<16x32xf32>
    %cst_37 = arith.constant dense<0.000000e+00> : vector<16xf32>
    %97 = vector.multi_reduction <add>, %96, %cst_37 [1] : vector<16x32xf32> to vector<16xf32>
    %98 = vector.shape_cast %97 : vector<16xf32> to vector<16x1xf32>
    %99 = vector.broadcast %92 : vector<16x1xf32> to vector<16x32xf32>
    %100 = arith.mulf %99, %54 : vector<16x32xf32>
    %101 = vector.broadcast %87 : vector<16x1xf32> to vector<16x32xf32>
    %102 = arith.mulf %101, %93 : vector<16x32xf32>
    %103 = arith.addf %100, %102 : vector<16x32xf32>
    %104 = math.tanh %103 : vector<16x32xf32>
    %105 = vector.broadcast %98 : vector<16x1xf32> to vector<16x32xf32>
    %106 = arith.mulf %105, %104 : vector<16x32xf32>
    %107 = arith.index_cast %c1_i32 : i32 to index
    %c0_38 = arith.constant 0 : index
    %c0_39 = arith.constant 0 : index
    %108 = vector.load %arg9[%107, %c0_38, %c0_39] : memref<4x16x32xf32, #tpu.memory_space<vmem>>, vector<1x16x32xf32>
    %109 = vector.shape_cast %108 : vector<1x16x32xf32> to vector<16x32xf32>
    %110 = vector.shape_cast %106 : vector<16x32xf32> to vector<1x16x32xf32>
    tpu.vector_store %arg9[%107, %c0_38, %c0_39], %110 {strides = array<i32>} : memref<4x16x32xf32, #tpu.memory_space<vmem>>, vector<1x16x32xf32>,
    %c2_i32 = arith.constant 2 : i32
    %111 = arith.index_cast %c2_i32 : i32 to index
    %c0_40 = arith.constant 0 : index
    %c0_41 = arith.constant 0 : index
    %112 = vector.load %arg0[%111, %c0_40, %c0_41] : memref<4x16x8xf32, #tpu.memory_space<vmem>>, vector<1x16x8xf32>
    %113 = vector.shape_cast %112 : vector<1x16x8xf32> to vector<16x8xf32>
    %114 = arith.index_cast %c2_i32 : i32 to index
    %c0_42 = arith.constant 0 : index
    %c0_43 = arith.constant 0 : index
    %115 = vector.load %arg1[%114, %c0_42, %c0_43] : memref<4x16x16xf32, #tpu.memory_space<vmem>>, vector<1x16x16xf32>
    %116 = vector.shape_cast %115 : vector<1x16x16xf32> to vector<16x16xf32>
    %cst_44 = arith.constant dense<0.000000e+00> : vector<16x128xf32>
    %117 = tpu.matmul %113, %1, %cst_44 {dimension_numbers = #tpu.dot_dimension_numbers<[1], [0], [0], [1], [0, 0, 1, 1], [], []>} : vector<16x8xf32>, vector<8x128xf32>, vector<16x128xf32> -> vector<16x128xf32>
    %cst_45 = arith.constant dense<0.000000e+00> : vector<16x128xf32>
    %118 = tpu.matmul %113, %0, %cst_45 {dimension_numbers = #tpu.dot_dimension_numbers<[1], [0], [0], [1], [0, 0, 1, 1], [], []>} : vector<16x8xf32>, vector<8x128xf32>, vector<16x128xf32> -> vector<16x128xf32>
    %cst_46 = arith.constant dense<0.000000e+00> : vector<16x128xf32>
    %119 = tpu.matmul %116, %117, %cst_46 {dimension_numbers = #tpu.dot_dimension_numbers<[1], [0], [0], [1], [0, 0, 1, 1], [], []>} : vector<16x16xf32>, vector<16x128xf32>, vector<16x128xf32> -> vector<16x128xf32>
    %120 = arith.addf %118, %119 : vector<16x128xf32>
    %cst_47 = arith.constant dense<0.000000e+00> : vector<16x128xf32>
    %121 = tpu.matmul %106, %2, %cst_47 {dimension_numbers = #tpu.dot_dimension_numbers<[1], [0], [0], [1], [0, 0, 1, 1], [], []>} : vector<16x32xf32>, vector<32x128xf32>, vector<16x128xf32> -> vector<16x128xf32>
    %122 = arith.addf %120, %121 : vector<16x128xf32>
    %123 = vector.broadcast %3 : vector<1x128xf32> to vector<16x128xf32>
    %124 = arith.addf %122, %123 : vector<16x128xf32>
    %125 = math.tanh %124 : vector<16x128xf32>
    %126 = arith.negf %124 : vector<16x128xf32>
    %127 = math.exp %126 : vector<16x128xf32>
    %cst_48 = arith.constant 1.000000e+00 : f32
    %128 = vector.broadcast %cst_48 : f32 to vector<16x128xf32>
    %129 = arith.addf %128, %127 : vector<16x128xf32>
    %130 = arith.divf %128, %129 : vector<16x128xf32>
    %131 = arith.select %10, %125, %130 : vector<16x128xi1>, vector<16x128xf32>
    %132 = vector.extract_strided_slice %131 {offsets = [0, 0], sizes = [16, 32], strides = [1, 1]} : vector<16x128xf32> to vector<16x32xf32>
    %133 = vector.broadcast %4 : vector<1x32xf32> to vector<16x32xf32>
    %134 = arith.mulf %132, %133 : vector<16x32xf32>
    %cst_49 = arith.constant dense<0.000000e+00> : vector<16xf32>
    %135 = vector.multi_reduction <add>, %134, %cst_49 [1] : vector<16x32xf32> to vector<16xf32>
    %136 = vector.shape_cast %135 : vector<16xf32> to vector<16x1xf32>
    %137 = vector.extract_strided_slice %131 {offsets = [0, 32], sizes = [16, 32], strides = [1, 1]} : vector<16x128xf32> to vector<16x32xf32>
    %138 = vector.broadcast %4 : vector<1x32xf32> to vector<16x32xf32>
    %139 = arith.mulf %137, %138 : vector<16x32xf32>
    %cst_50 = arith.constant dense<0.000000e+00> : vector<16xf32>
    %140 = vector.multi_reduction <add>, %139, %cst_50 [1] : vector<16x32xf32> to vector<16xf32>
    %141 = vector.shape_cast %140 : vector<16xf32> to vector<16x1xf32>
    %142 = vector.extract_strided_slice %131 {offsets = [0, 64], sizes = [16, 32], strides = [1, 1]} : vector<16x128xf32> to vector<16x32xf32>
    %143 = vector.extract_strided_slice %131 {offsets = [0, 96], sizes = [16, 32], strides = [1, 1]} : vector<16x128xf32> to vector<16x32xf32>
    %144 = vector.broadcast %4 : vector<1x32xf32> to vector<16x32xf32>
    %145 = arith.mulf %143, %144 : vector<16x32xf32>
    %cst_51 = arith.constant dense<0.000000e+00> : vector<16xf32>
    %146 = vector.multi_reduction <add>, %145, %cst_51 [1] : vector<16x32xf32> to vector<16xf32>
    %147 = vector.shape_cast %146 : vector<16xf32> to vector<16x1xf32>
    %148 = vector.broadcast %141 : vector<16x1xf32> to vector<16x32xf32>
    %149 = arith.mulf %148, %103 : vector<16x32xf32>
    %150 = vector.broadcast %136 : vector<16x1xf32> to vector<16x32xf32>
    %151 = arith.mulf %150, %142 : vector<16x32xf32>
    %152 = arith.addf %149, %151 : vector<16x32xf32>
    %153 = math.tanh %152 : vector<16x32xf32>
    %154 = vector.broadcast %147 : vector<16x1xf32> to vector<16x32xf32>
    %155 = arith.mulf %154, %153 : vector<16x32xf32>
    %156 = arith.index_cast %c2_i32 : i32 to index
    %c0_52 = arith.constant 0 : index
    %c0_53 = arith.constant 0 : index
    %157 = vector.load %arg9[%156, %c0_52, %c0_53] : memref<4x16x32xf32, #tpu.memory_space<vmem>>, vector<1x16x32xf32>
    %158 = vector.shape_cast %157 : vector<1x16x32xf32> to vector<16x32xf32>
    %159 = vector.shape_cast %155 : vector<16x32xf32> to vector<1x16x32xf32>
    tpu.vector_store %arg9[%156, %c0_52, %c0_53], %159 {strides = array<i32>} : memref<4x16x32xf32, #tpu.memory_space<vmem>>, vector<1x16x32xf32>,
    %c3_i32 = arith.constant 3 : i32
    %160 = arith.index_cast %c3_i32 : i32 to index
    %c0_54 = arith.constant 0 : index
    %c0_55 = arith.constant 0 : index
    %161 = vector.load %arg0[%160, %c0_54, %c0_55] : memref<4x16x8xf32, #tpu.memory_space<vmem>>, vector<1x16x8xf32>
    %162 = vector.shape_cast %161 : vector<1x16x8xf32> to vector<16x8xf32>
    %163 = arith.index_cast %c3_i32 : i32 to index
    %c0_56 = arith.constant 0 : index
    %c0_57 = arith.constant 0 : index
    %164 = vector.load %arg1[%163, %c0_56, %c0_57] : memref<4x16x16xf32, #tpu.memory_space<vmem>>, vector<1x16x16xf32>
    %165 = vector.shape_cast %164 : vector<1x16x16xf32> to vector<16x16xf32>
    %cst_58 = arith.constant dense<0.000000e+00> : vector<16x128xf32>
    %166 = tpu.matmul %162, %1, %cst_58 {dimension_numbers = #tpu.dot_dimension_numbers<[1], [0], [0], [1], [0, 0, 1, 1], [], []>} : vector<16x8xf32>, vector<8x128xf32>, vector<16x128xf32> -> vector<16x128xf32>
    %cst_59 = arith.constant dense<0.000000e+00> : vector<16x128xf32>
    %167 = tpu.matmul %162, %0, %cst_59 {dimension_numbers = #tpu.dot_dimension_numbers<[1], [0], [0], [1], [0, 0, 1, 1], [], []>} : vector<16x8xf32>, vector<8x128xf32>, vector<16x128xf32> -> vector<16x128xf32>
    %cst_60 = arith.constant dense<0.000000e+00> : vector<16x128xf32>
    %168 = tpu.matmul %165, %166, %cst_60 {dimension_numbers = #tpu.dot_dimension_numbers<[1], [0], [0], [1], [0, 0, 1, 1], [], []>} : vector<16x16xf32>, vector<16x128xf32>, vector<16x128xf32> -> vector<16x128xf32>
    %169 = arith.addf %167, %168 : vector<16x128xf32>
    %cst_61 = arith.constant dense<0.000000e+00> : vector<16x128xf32>
    %170 = tpu.matmul %155, %2, %cst_61 {dimension_numbers = #tpu.dot_dimension_numbers<[1], [0], [0], [1], [0, 0, 1, 1], [], []>} : vector<16x32xf32>, vector<32x128xf32>, vector<16x128xf32> -> vector<16x128xf32>
    %171 = arith.addf %169, %170 : vector<16x128xf32>
    %172 = vector.broadcast %3 : vector<1x128xf32> to vector<16x128xf32>
    %173 = arith.addf %171, %172 : vector<16x128xf32>
    %174 = math.tanh %173 : vector<16x128xf32>
    %175 = arith.negf %173 : vector<16x128xf32>
    %176 = math.exp %175 : vector<16x128xf32>
    %cst_62 = arith.constant 1.000000e+00 : f32
    %177 = vector.broadcast %cst_62 : f32 to vector<16x128xf32>
    %178 = arith.addf %177, %176 : vector<16x128xf32>
    %179 = arith.divf %177, %178 : vector<16x128xf32>
    %180 = arith.select %10, %174, %179 : vector<16x128xi1>, vector<16x128xf32>
    %181 = vector.extract_strided_slice %180 {offsets = [0, 0], sizes = [16, 32], strides = [1, 1]} : vector<16x128xf32> to vector<16x32xf32>
    %182 = vector.broadcast %4 : vector<1x32xf32> to vector<16x32xf32>
    %183 = arith.mulf %181, %182 : vector<16x32xf32>
    %cst_63 = arith.constant dense<0.000000e+00> : vector<16xf32>
    %184 = vector.multi_reduction <add>, %183, %cst_63 [1] : vector<16x32xf32> to vector<16xf32>
    %185 = vector.shape_cast %184 : vector<16xf32> to vector<16x1xf32>
    %186 = vector.extract_strided_slice %180 {offsets = [0, 32], sizes = [16, 32], strides = [1, 1]} : vector<16x128xf32> to vector<16x32xf32>
    %187 = vector.broadcast %4 : vector<1x32xf32> to vector<16x32xf32>
    %188 = arith.mulf %186, %187 : vector<16x32xf32>
    %cst_64 = arith.constant dense<0.000000e+00> : vector<16xf32>
    %189 = vector.multi_reduction <add>, %188, %cst_64 [1] : vector<16x32xf32> to vector<16xf32>
    %190 = vector.shape_cast %189 : vector<16xf32> to vector<16x1xf32>
    %191 = vector.extract_strided_slice %180 {offsets = [0, 64], sizes = [16, 32], strides = [1, 1]} : vector<16x128xf32> to vector<16x32xf32>
    %192 = vector.extract_strided_slice %180 {offsets = [0, 96], sizes = [16, 32], strides = [1, 1]} : vector<16x128xf32> to vector<16x32xf32>
    %193 = vector.broadcast %4 : vector<1x32xf32> to vector<16x32xf32>
    %194 = arith.mulf %192, %193 : vector<16x32xf32>
    %cst_65 = arith.constant dense<0.000000e+00> : vector<16xf32>
    %195 = vector.multi_reduction <add>, %194, %cst_65 [1] : vector<16x32xf32> to vector<16xf32>
    %196 = vector.shape_cast %195 : vector<16xf32> to vector<16x1xf32>
    %197 = vector.broadcast %190 : vector<16x1xf32> to vector<16x32xf32>
    %198 = arith.mulf %197, %152 : vector<16x32xf32>
    %199 = vector.broadcast %185 : vector<16x1xf32> to vector<16x32xf32>
    %200 = arith.mulf %199, %191 : vector<16x32xf32>
    %201 = arith.addf %198, %200 : vector<16x32xf32>
    %202 = math.tanh %201 : vector<16x32xf32>
    %203 = vector.broadcast %196 : vector<16x1xf32> to vector<16x32xf32>
    %204 = arith.mulf %203, %202 : vector<16x32xf32>
    %205 = arith.index_cast %c3_i32 : i32 to index
    %c0_66 = arith.constant 0 : index
    %c0_67 = arith.constant 0 : index
    %206 = vector.load %arg9[%205, %c0_66, %c0_67] : memref<4x16x32xf32, #tpu.memory_space<vmem>>, vector<1x16x32xf32>
    %207 = vector.shape_cast %206 : vector<1x16x32xf32> to vector<16x32xf32>
    %208 = vector.shape_cast %204 : vector<16x32xf32> to vector<1x16x32xf32>
    tpu.vector_store %arg9[%205, %c0_66, %c0_67], %208 {strides = array<i32>} : memref<4x16x32xf32, #tpu.memory_space<vmem>>, vector<1x16x32xf32>,
    %c4_i32 = arith.constant 4 : i32
    return
  }
}

</mosaic_0001>

<llo_original>
// kernel: glstm_forward.1
$region0: #{glstm_forward.1}
  #allocation0 [shape = 'u32[]', space=smem, size = 0x4, offset = 0x4, fixed_abs, tag = 'smem constant byte address 0x4 - core index']
  #allocation1 [shape = 'u32[144,128]{1,0:T(1,128)}', space=vmem, size = 0x12000, scoped, tag = 'internal scratch']
  %s0 = inlined_call_operand.vmem [shape: f32[4,16,8], index: 0, kind: input, shape index: {}]
  %s1 = inlined_call_operand.vmem [shape: f32[4,16,16], index: 1, kind: input, shape index: {}]
  %s2 = inlined_call_operand.vmem [shape: f32[16,32], index: 2, kind: input, shape index: {}]
  %s3 = inlined_call_operand.vmem [shape: f32[16,32], index: 3, kind: input, shape index: {}]
  %s4 = inlined_call_operand.vmem [shape: f32[8,128], index: 4, kind: input, shape index: {}]
  %s5 = inlined_call_operand.vmem [shape: f32[8,128], index: 5, kind: input, shape index: {}]
  %s6 = inlined_call_operand.vmem [shape: f32[32,128], index: 6, kind: input, shape index: {}]
  %s7 = inlined_call_operand.vmem [shape: f32[1,128], index: 7, kind: input, shape index: {}]
  %s8 = inlined_call_operand.vmem [shape: f32[1,32], index: 8, kind: input, shape index: {}]
  %s9 = inlined_call_operand.vmem [shape: f32[4,16,32], index: 9, kind: output, shape index: {}]
  %s10 = sld [smem:[#allocation0]]
  $region46: #{glstm_forward.1} parent=0
    _
  %s12 = ssub.s32 1, %s10
  %s13 = scalar_select 0, %s12, %s10
  // Predicated region
  $region2: #{glstm_forward.1} parent=0 // pred_check
    _
  $region3: #{glstm_forward.1} parent=0 // pred_check_branch
    %15 = sbr.rel (0) target = $region5
  $region4: #{glstm_forward.1} parent=0 // pred_region
    _
  $region5: #{glstm_forward.1} parent=0 // pred_fallthru
    _
  // Predicated region
  $region6: #{glstm_forward.1} parent=0 // pred_check
    _
  $region7: #{glstm_forward.1} parent=0 // pred_check_branch
    %17 = sbr.rel (0) target = $region9
  $region8: #{glstm_forward.1} parent=0 // pred_region
    _
  $region9: #{glstm_forward.1} parent=0 // pred_fallthru
    _
  // Predicated region
  $region10: #{glstm_forward.1} parent=0 // pred_check
    _
  $region11: #{glstm_forward.1} parent=0 // pred_check_branch
    %19 = sbr.rel (0) target = $region13
  $region12: #{glstm_forward.1} parent=0 // pred_region
    _
  $region13: #{glstm_forward.1} parent=0 // pred_fallthru
    _
  // Predicated region
  $region14: #{glstm_forward.1} parent=0 // pred_check
    _
  $region15: #{glstm_forward.1} parent=0 // pred_check_branch
    %21 = sbr.rel (0) target = $region17
  $region16: #{glstm_forward.1} parent=0 // pred_region
    _
  $region17: #{glstm_forward.1} parent=0 // pred_fallthru
    _
  // Predicated region
  $region18: #{glstm_forward.1} parent=0 // pred_check
    _
  $region19: #{glstm_forward.1} parent=0 // pred_check_branch
    %23 = sbr.rel (0) target = $region21
  $region20: #{glstm_forward.1} parent=0 // pred_region
    _
  $region21: #{glstm_forward.1} parent=0 // pred_fallthru
    _
  // Predicated region
  $region22: #{glstm_forward.1} parent=0 // pred_check
    _
  $region23: #{glstm_forward.1} parent=0 // pred_check_branch
    %25 = sbr.rel (0) target = $region25
  $region24: #{glstm_forward.1} parent=0 // pred_region
    _
  $region25: #{glstm_forward.1} parent=0 // pred_fallthru
    _
  // Predicated region
  $region26: #{glstm_forward.1} parent=0 // pred_check
    _
  $region27: #{glstm_forward.1} parent=0 // pred_check_branch
    %27 = sbr.rel (0) target = $region29
  $region28: #{glstm_forward.1} parent=0 // pred_region
    _
  $region29: #{glstm_forward.1} parent=0 // pred_fallthru
    _
  // Predicated region
  $region30: #{glstm_forward.1} parent=0 // pred_check
    _
  $region31: #{glstm_forward.1} parent=0 // pred_check_branch
    %29 = sbr.rel (0) target = $region33
  $region32: #{glstm_forward.1} parent=0 // pred_region
    _
  $region33: #{glstm_forward.1} parent=0 // pred_fallthru
    _
  // Predicated region
  $region34: #{glstm_forward.1} parent=0 // pred_check
    _
  $region35: #{glstm_forward.1} parent=0 // pred_check_branch
    %31 = sbr.rel (0) target = $region37
  $region36: #{glstm_forward.1} parent=0 // pred_region
    _
  $region37: #{glstm_forward.1} parent=0 // pred_fallthru
    _
  %v32 = vld [vmem:[%s4] sm:$0xff]
  %v33 = vld [vmem:[%s5] sm:$0xff]
  %v34 = vld [vmem:[%s6] sm:$0xff]
  %v35 = vld [vmem:[%s6 + $0x8] sm:$0xff]
  %v36 = vld [vmem:[%s6 + $0x10] sm:$0xff]
  %v37 = vld [vmem:[%s6 + $0x18] sm:$0xff]
  %v38 = vld [vmem:[%s7] sm:$0x1]
  %v39 = vld [vmem:[%s8] sm:$0x1]
  %v40 = vlaneseq
  %v41 = vand.u32 %v40, 127
  %vm42 = vcmp.ge.s32.totalorder %v41, 64
  %vm43 = vcmp.lt.s32.totalorder %v41, 96
  %vm44 = vmand %vm42, %vm43
  %v45 = vld [vmem:[%s2] sm:$0xff]
  %v46 = vld [vmem:[%s2 + $0x8] sm:$0xff]
  %v47 = vld [vmem:[%s3] sm:$0xff]
  %v48 = vld [vmem:[%s3 + $0x8] sm:$0xff]
  %v49 = vld [vmem:[%s0] sm:$0xff]
  %v50 = vld [vmem:[%s0 + $0x8] sm:$0xff]
  %v51 = vld [vmem:[%s1] sm:$0xff]
  %v52 = vld [vmem:[%s1 + $0x8] sm:$0xff]
  %vm53 = vcmask 64512
  %v55 = vsel %vm53, %v49, 0
  %v58 = vsel %vm53, %v50, 0
  %60 = vmatprep.subr.mxu0 0.0
  %61 = vmatpush1.msra.mxu0 %v33
  %62 = vmatprep.subr.mxu0 0.0
  %63 = vmatpush1.msra.mxu0 0.0
  %64 = vmatprep.subr.mxu0 0.0
  %65 = vmatpush1.msra.mxu0 0.0
  %66 = vmatprep.subr.mxu0 0.0
  %67 = vmatpush1.msra.mxu0 0.0
  %68 = vmatprep.subr.mxu0 0.0
  %69 = vmatpush1.msra.mxu0 0.0
  %70 = vmatprep.subr.mxu0 0.0
  %71 = vmatpush1.msra.mxu0 0.0
  %72 = vmatprep.subr.mxu0 0.0
  %73 = vmatpush1.msra.mxu0 0.0
  %74 = vmatprep.subr.mxu0 0.0
  %75 = vmatpush1.msra.mxu0 0.0
  %76 = vmatprep.subr.mxu0 0.0
  %77 = vmatpush1.msra.mxu0 0.0
  %78 = vmatprep.subr.mxu0 0.0
  %79 = vmatpush1.msra.mxu0 0.0
  %80 = vmatprep.subr.mxu0 0.0
  %81 = vmatpush1.msra.mxu0 0.0
  %82 = vmatprep.subr.mxu0 0.0
  %83 = vmatpush1.msra.mxu0 0.0
  %84 = vmatprep.subr.mxu0 0.0
  %85 = vmatpush1.msra.mxu0 0.0
  %86 = vmatprep.subr.mxu0 0.0
  %87 = vmatpush1.msra.mxu0 0.0
  %88 = vmatprep.subr.mxu0 0.0
  %89 = vmatpush1.msra.mxu0 0.0
  %90 = vmatprep.subr.mxu0 0.0
  %91 = vmatpush1.msra.mxu0 0.0
  %92 = vmatprep.subr.mxu0 0.0
  %93 = vmatpush1.msra.mxu0 0.0
  %94 = vmatprep.subr.mxu0 0.0
  %95 = vmatpush1.msra.mxu0 0.0
  %96 = vmatprep.subr.mxu0 0.0
  %97 = vmatpush1.msra.mxu0 0.0
  %98 = vmatprep.subr.mxu0 0.0
  %99 = vmatpush1.msra.mxu0 0.0
  %100 = vmatprep.subr.mxu0 0.0
  %101 = vmatpush1.msra.mxu0 0.0
  %102 = vmatprep.subr.mxu0 0.0
  %103 = vmatpush1.msra.mxu0 0.0
  %104 = vmatprep.subr.mxu0 0.0
  %105 = vmatpush1.msra.mxu0 0.0
  %106 = vmatprep.subr.mxu0 0.0
  %107 = vmatpush1.msra.mxu0 0.0
  %108 = vmatprep.subr.mxu0 0.0
  %109 = vmatpush1.msra.mxu0 0.0
  %110 = vmatprep.subr.mxu0 0.0
  %111 = vmatpush1.msra.mxu0 0.0
  %112 = vmatprep.subr.mxu0 0.0
  %113 = vmatpush1.msra.mxu0 0.0
  %114 = vmatprep.subr.mxu0 0.0
  %115 = vmatpush1.msra.mxu0 0.0
  %116 = vmatprep.subr.mxu0 0.0
  %117 = vmatpush1.msra.mxu0 0.0
  %118 = vmatprep.subr.mxu0 0.0
  %119 = vmatpush1.msra.mxu0 0.0
  %120 = vmatprep.subr.mxu0 0.0
  %121 = vmatpush1.msra.mxu0 0.0
  %122 = vmatprep.subr.mxu0 0.0
  %123 = vmatpush1.msra.mxu0 0.0
  %124 = vmatprep.mubr.f32.mxu0 0.0
  %125 = vmatmul.mubr.f32.gmra.mrb[0].mxu0 %v55
  %v126 = vpop.f32.mrb[0].mxu0
  %v127 = vadd.f32 0.0, %v126
  %v128 = vpop.f32.mrb[0].mxu0
  %129 = vmatprep.mubr.f32.mxu0 0.0
  %130 = vmatmul.mubr.f32.gmra.mrb[0].mxu0 %v58
  %v131 = vpop.f32.mrb[0].mxu0
  %v132 = vadd.f32 0.0, %v131
  %v133 = vpop.f32.mrb[0].mxu0
  %134 = vdwg.mxu0
  %vm135 = vcmask 130048
  %v137 = vsel %vm135, %v51, 0
  %v140 = vsel %vm135, %v52, 0
  %142 = vmatprep.subr.mxu0 0.0
  %143 = vmatpush1.msra.mxu0 %v127
  %144 = vmatprep.subr.mxu0 0.0
  %145 = vmatpush1.msra.mxu0 %v132
  %146 = vmatprep.subr.mxu0 0.0
  %147 = vmatpush1.msra.mxu0 0.0
  %148 = vmatprep.subr.mxu0 0.0
  %149 = vmatpush1.msra.mxu0 0.0
  %150 = vmatprep.subr.mxu0 0.0
  %151 = vmatpush1.msra.mxu0 0.0
  %152 = vmatprep.subr.mxu0 0.0
  %153 = vmatpush1.msra.mxu0 0.0
  %154 = vmatprep.subr.mxu0 0.0
  %155 = vmatpush1.msra.mxu0 0.0
  %156 = vmatprep.subr.mxu0 0.0
  %157 = vmatpush1.msra.mxu0 0.0
  %158 = vmatprep.subr.mxu0 0.0
  %159 = vmatpush1.msra.mxu0 0.0
  %160 = vmatprep.subr.mxu0 0.0
  %161 = vmatpush1.msra.mxu0 0.0
  %162 = vmatprep.subr.mxu0 0.0
  %163 = vmatpush1.msra.mxu0 0.0
  %164 = vmatprep.subr.mxu0 0.0
  %165 = vmatpush1.msra.mxu0 0.0
  %166 = vmatprep.subr.mxu0 0.0
  %167 = vmatpush1.msra.mxu0 0.0
  %168 = vmatprep.subr.mxu0 0.0
  %169 = vmatpush1.msra.mxu0 0.0
  %170 = vmatprep.subr.mxu0 0.0
  %171 = vmatpush1.msra.mxu0 0.0
  %172 = vmatprep.subr.mxu0 0.0
  %173 = vmatpush1.msra.mxu0 0.0
  %174 = vmatprep.subr.mxu0 0.0
  %175 = vmatpush1.msra.mxu0 0.0
  %176 = vmatprep.subr.mxu0 0.0
  %177 = vmatpush1.msra.mxu0 0.0
  %178 = vmatprep.subr.mxu0 0.0
  %179 = vmatpush1.msra.mxu0 0.0
  %180 = vmatprep.subr.mxu0 0.0
  %181 = vmatpush1.msra.mxu0 0.0
  %182 = vmatprep.subr.mxu0 0.0
  %183 = vmatpush1.msra.mxu0 0.0
  %184 = vmatprep.subr.mxu0 0.0
  %185 = vmatpush1.msra.mxu0 0.0
  %186 = vmatprep.subr.mxu0 0.0
  %187 = vmatpush1.msra.mxu0 0.0
  %188 = vmatprep.subr.mxu0 0.0
  %189 = vmatpush1.msra.mxu0 0.0
  %190 = vmatprep.subr.mxu0 0.0
  %191 = vmatpush1.msra.mxu0 0.0
  %192 = vmatprep.subr.mxu0 0.0
  %193 = vmatpush1.msra.mxu0 0.0
  %194 = vmatprep.subr.mxu0 0.0
  %195 = vmatpush1.msra.mxu0 0.0
  %196 = vmatprep.subr.mxu0 0.0
  %197 = vmatpush1.msra.mxu0 0.0
  %198 = vmatprep.subr.mxu0 0.0
  %199 = vmatpush1.msra.mxu0 0.0
  %200 = vmatprep.subr.mxu0 0.0
  %201 = vmatpush1.msra.mxu0 0.0
  %202 = vmatprep.subr.mxu0 0.0
  %203 = vmatpush1.msra.mxu0 0.0
  %204 = vmatprep.subr.mxu0 0.0
  %205 = vmatpush1.msra.mxu0 0.0
  %206 = vmatprep.mubr.f32.mxu0 0.0
  %207 = vmatmul.mubr.f32.gmra.mrb[0].mxu0 %v137
  %v208 = vpop.f32.mrb[0].mxu0
  %v209 = vadd.f32 0.0, %v208
  %v210 = vpop.f32.mrb[0].mxu0
  %211 = vmatprep.mubr.f32.mxu0 0.0
  %212 = vmatmul.mubr.f32.gmra.mrb[0].mxu0 %v140
  %v213 = vpop.f32.mrb[0].mxu0
  %v214 = vadd.f32 0.0, %v213
  %v215 = vpop.f32.mrb[0].mxu0
  %216 = vdwg.mxu0
  %217 = vmatprep.subr.mxu0 0.0
  %218 = vmatpush1.msra.mxu0 %v32
  %219 = vmatprep.subr.mxu0 0.0
  %220 = vmatpush1.msra.mxu0 0.0
  %221 = vmatprep.subr.mxu0 0.0
  %222 = vmatpush1.msra.mxu0 0.0
  %223 = vmatprep.subr.mxu0 0.0
  %224 = vmatpush1.msra.mxu0 0.0
  %225 = vmatprep.subr.mxu0 0.0
  %226 = vmatpush1.msra.mxu0 0.0
  %227 = vmatprep.subr.mxu0 0.0
  %228 = vmatpush1.msra.mxu0 0.0
  %229 = vmatprep.subr.mxu0 0.0
  %230 = vmatpush1.msra.mxu0 0.0
  %231 = vmatprep.subr.mxu0 0.0
  %232 = vmatpush1.msra.mxu0 0.0
  %233 = vmatprep.subr.mxu0 0.0
  %234 = vmatpush1.msra.mxu0 0.0
  %235 = vmatprep.subr.mxu0 0.0
  %236 = vmatpush1.msra.mxu0 0.0
  %237 = vmatprep.subr.mxu0 0.0
  %238 = vmatpush1.msra.mxu0 0.0
  %239 = vmatprep.subr.mxu0 0.0
  %240 = vmatpush1.msra.mxu0 0.0
  %241 = vmatprep.subr.mxu0 0.0
  %242 = vmatpush1.msra.mxu0 0.0
  %243 = vmatprep.subr.mxu0 0.0
  %244 = vmatpush1.msra.mxu0 0.0
  %245 = vmatprep.subr.mxu0 0.0
  %246 = vmatpush1.msra.mxu0 0.0
  %247 = vmatprep.subr.mxu0 0.0
  %248 = vmatpush1.msra.mxu0 0.0
  %249 = vmatprep.subr.mxu0 0.0
  %250 = vmatpush1.msra.mxu0 0.0
  %251 = vmatprep.subr.mxu0 0.0
  %252 = vmatpush1.msra.mxu0 0.0
  %253 = vmatprep.subr.mxu0 0.0
  %254 = vmatpush1.msra.mxu0 0.0
  %255 = vmatprep.subr.mxu0 0.0
  %256 = vmatpush1.msra.mxu0 0.0
  %257 = vmatprep.subr.mxu0 0.0
  %258 = vmatpush1.msra.mxu0 0.0
  %259 = vmatprep.subr.mxu0 0.0
  %260 = vmatpush1.msra.mxu0 0.0
  %261 = vmatprep.subr.mxu0 0.0
  %262 = vmatpush1.msra.mxu0 0.0
  %263 = vmatprep.subr.mxu0 0.0
  %264 = vmatpush1.msra.mxu0 0.0
  %265 = vmatprep.subr.mxu0 0.0
  %266 = vmatpush1.msra.mxu0 0.0
  %267 = vmatprep.subr.mxu0 0.0
  %268 = vmatpush1.msra.mxu0 0.0
  %269 = vmatprep.subr.mxu0 0.0
  %270 = vmatpush1.msra.mxu0 0.0
  %271 = vmatprep.subr.mxu0 0.0
  %272 = vmatpush1.msra.mxu0 0.0
  %273 = vmatprep.subr.mxu0 0.0
  %274 = vmatpush1.msra.mxu0 0.0
  %275 = vmatprep.subr.mxu0 0.0
  %276 = vmatpush1.msra.mxu0 0.0
  %277 = vmatprep.subr.mxu0 0.0
  %278 = vmatpush1.msra.mxu0 0.0
  %279 = vmatprep.subr.mxu0 0.0
  %280 = vmatpush1.msra.mxu0 0.0
  %281 = vmatprep.mubr.f32.mxu0 0.0
  %282 = vmatmul.mubr.f32.gmra.mrb[0].mxu0 %v55
  %v283 = vpop.f32.mrb[0].mxu0
  %v284 = vadd.f32 %v209, %v283
  %v285 = vpop.f32.mrb[0].mxu0
  %286 = vmatprep.mubr.f32.mxu0 0.0
  %287 = vmatmul.mubr.f32.gmra.mrb[0].mxu0 %v58
  %v288 = vpop.f32.mrb[0].mxu0
  %v289 = vadd.f32 %v214, %v288
  %v290 = vpop.f32.mrb[0].mxu0
  %291 = vdwg.mxu0
  %vm292 = vcmask 261120
  %v294 = vsel %vm292, %v45, 0
  %v297 = vsel %vm292, %v46, 0
  %299 = vmatprep.subr.mxu0 0.0
  %300 = vmatpush1.msra.mxu0 %v34
  %301 = vmatprep.subr.mxu0 0.0
  %302 = vmatpush1.msra.mxu0 %v35
  %303 = vmatprep.subr.mxu0 0.0
  %304 = vmatpush1.msra.mxu0 %v36
  %305 = vmatprep.subr.mxu0 0.0
  %306 = vmatpush1.msra.mxu0 %v37
  %307 = vmatprep.subr.mxu0 0.0
  %308 = vmatpush1.msra.mxu0 0.0
  %309 = vmatprep.subr.mxu0 0.0
  %310 = vmatpush1.msra.mxu0 0.0
  %311 = vmatprep.subr.mxu0 0.0
  %312 = vmatpush1.msra.mxu0 0.0
  %313 = vmatprep.subr.mxu0 0.0
  %314 = vmatpush1.msra.mxu0 0.0
  %315 = vmatprep.subr.mxu0 0.0
  %316 = vmatpush1.msra.mxu0 0.0
  %317 = vmatprep.subr.mxu0 0.0
  %318 = vmatpush1.msra.mxu0 0.0
  %319 = vmatprep.subr.mxu0 0.0
  %320 = vmatpush1.msra.mxu0 0.0
  %321 = vmatprep.subr.mxu0 0.0
  %322 = vmatpush1.msra.mxu0 0.0
  %323 = vmatprep.subr.mxu0 0.0
  %324 = vmatpush1.msra.mxu0 0.0
  %325 = vmatprep.subr.mxu0 0.0
  %326 = vmatpush1.msra.mxu0 0.0
  %327 = vmatprep.subr.mxu0 0.0
  %328 = vmatpush1.msra.mxu0 0.0
  %329 = vmatprep.subr.mxu0 0.0
  %330 = vmatpush1.msra.mxu0 0.0
  %331 = vmatprep.subr.mxu0 0.0
  %332 = vmatpush1.msra.mxu0 0.0
  %333 = vmatprep.subr.mxu0 0.0
  %334 = vmatpush1.msra.mxu0 0.0
  %335 = vmatprep.subr.mxu0 0.0
  %336 = vmatpush1.msra.mxu0 0.0
  %337 = vmatprep.subr.mxu0 0.0
  %338 = vmatpush1.msra.mxu0 0.0
  %339 = vmatprep.subr.mxu0 0.0
  %340 = vmatpush1.msra.mxu0 0.0
  %341 = vmatprep.subr.mxu0 0.0
  %342 = vmatpush1.msra.mxu0 0.0
  %343 = vmatprep.subr.mxu0 0.0
  %344 = vmatpush1.msra.mxu0 0.0
  %345 = vmatprep.subr.mxu0 0.0
  %346 = vmatpush1.msra.mxu0 0.0
  %347 = vmatprep.subr.mxu0 0.0
  %348 = vmatpush1.msra.mxu0 0.0
  %349 = vmatprep.subr.mxu0 0.0
  %350 = vmatpush1.msra.mxu0 0.0
  %351 = vmatprep.subr.mxu0 0.0
  %352 = vmatpush1.msra.mxu0 0.0
  %353 = vmatprep.subr.mxu0 0.0
  %354 = vmatpush1.msra.mxu0 0.0
  %355 = vmatprep.subr.mxu0 0.0
  %356 = vmatpush1.msra.mxu0 0.0
  %357 = vmatprep.subr.mxu0 0.0
  %358 = vmatpush1.msra.mxu0 0.0
  %359 = vmatprep.subr.mxu0 0.0
  %360 = vmatpush1.msra.mxu0 0.0
  %361 = vmatprep.subr.mxu0 0.0
  %362 = vmatpush1.msra.mxu0 0.0
  %363 = vmatprep.mubr.f32.mxu0 0.0
  %364 = vmatmul.mubr.f32.gmra.mrb[0].mxu0 %v294
  %v365 = vpop.f32.mrb[0].mxu0
  %v366 = vadd.f32 0.0, %v365
  %v367 = vpop.f32.mrb[0].mxu0
  %368 = vmatprep.mubr.f32.mxu0 0.0
  %369 = vmatmul.mubr.f32.gmra.mrb[0].mxu0 %v297
  %v370 = vpop.f32.mrb[0].mxu0
  %v371 = vadd.f32 0.0, %v370
  %v372 = vpop.f32.mrb[0].mxu0
  %373 = vdwg.mxu0
  %v374 = vadd.f32 %v284, %v366
  %v375 = vadd.f32 %v289, %v371
  %v377 = vlaneseq
  %v378 = vshrl.u32 %v377, 7
  %v379 = vsub.s32 0, %v378
  %v380 = vrot.slane %v38, %v379
  %v382 = vadd.f32 %v374, %v380
  %v383 = vadd.f32 %v375, %v380
  %v384 = vtanh.pop %v382
  %v385 = vtanh.pop %v383
  %v386 = vxor.u32 %v382, 2147483648
  %v387 = vxor.u32 %v383, 2147483648
  %v388 = vmul.f32 %v386, 1.442695
  %v389 = vpow.pop %v388
  %v390 = vmul.f32 %v387, 1.442695
  %v391 = vpow.pop %v390
  %v392 = vadd.f32 %v389, 1.0
  %v393 = vadd.f32 %v391, 1.0
  %v394 = vrcp.pop %v392
  %v395 = vmul.f32 1.0, %v394
  %v396 = vrcp.pop %v393
  %v397 = vmul.f32 1.0, %v396
  %v398 = vsel %vm44, %v384, %v395
  %v399 = vsel %vm44, %v385, %v397
  %v401 = vlaneseq
  %v402 = vshrl.u32 %v401, 7
  %v403 = vsub.s32 0, %v402
  %v404 = vrot.slane %v39, %v403
  %v406 = vmul.f32 %v398, %v404
  %v407 = vmul.f32 %v399, %v404
  %v408 = vsel %vm292, %v406, 0.0
  %409 = vadd.xlane.f32.xlu0 %v408
  %v410 = vpop.xlane.xlu0 %409
  %v411 = vsel %vm292, %v407, 0.0
  %412 = vadd.xlane.f32.xlu0 %v411
  %v413 = vpop.xlane.xlu0 %412
  %414 = vrot.lane.b32.xlu0 %v404, 32
  %v415 = vpop.permute.xlu0 %414
  %v417 = vmul.f32 %v398, %v415
  %v418 = vmul.f32 %v399, %v415
  %421 = vrot.lane.b32.xlu0 %v417, 96
  %v422 = vpop.permute.xlu0 %421
  %423 = vrot.lane.b32.xlu0 %v418, 96
  %v424 = vpop.permute.xlu0 %423
  %v427 = vsel %vm292, %v422, 0.0
  %428 = vadd.xlane.f32.xlu0 %v427
  %v429 = vpop.xlane.xlu0 %428
  %v430 = vsel %vm292, %v424, 0.0
  %431 = vadd.xlane.f32.xlu0 %v430
  %v432 = vpop.xlane.xlu0 %431
  %433 = vrot.lane.b32.xlu0 %v404, 96
  %v434 = vpop.permute.xlu0 %433
  %v436 = vmul.f32 %v398, %v434
  %v437 = vmul.f32 %v399, %v434
  %440 = vrot.lane.b32.xlu0 %v436, 32
  %v441 = vpop.permute.xlu0 %440
  %442 = vrot.lane.b32.xlu0 %v437, 32
  %v443 = vpop.permute.xlu0 %442
  %v446 = vsel %vm292, %v441, 0.0
  %447 = vadd.xlane.f32.xlu0 %v446
  %v448 = vpop.xlane.xlu0 %447
  %v449 = vsel %vm292, %v443, 0.0
  %450 = vadd.xlane.f32.xlu0 %v449
  %v451 = vpop.xlane.xlu0 %450
  %v452 = vmul.f32 %v429, %v47
  %v453 = vmul.f32 %v432, %v48
  %v454 = vmul.f32 %v410, %v398
  %v455 = vmul.f32 %v413, %v399
  %458 = vrot.lane.b32.xlu0 %v454, 64
  %v459 = vpop.permute.xlu0 %458
  %460 = vrot.lane.b32.xlu0 %v455, 64
  %v461 = vpop.permute.xlu0 %460
  %v464 = vadd.f32 %v452, %v459
  %v465 = vadd.f32 %v453, %v461
  %v466 = vtanh.pop %v464
  %v467 = vtanh.pop %v465
  %v468 = vmul.f32 %v448, %v466
  %v469 = vmul.f32 %v451, %v467
  %470 = vst.msk [vmem:[%s9] sm:$0xff] %vm292, %v468
  %471 = vst.msk [vmem:[%s9 + $0x8] sm:$0xff] %vm292, %v469
  %s472 = scalar_lea.vmem %s0, 16
  %v473 = vld [vmem:[%s472] sm:$0xff]
  %v474 = vld [vmem:[%s472 + $0x8] sm:$0xff]
  %s475 = scalar_lea.vmem %s1, 16
  %v476 = vld [vmem:[%s475] sm:$0xff]
  %v477 = vld [vmem:[%s475 + $0x8] sm:$0xff]
  %v479 = vsel %vm53, %v473, 0
  %v482 = vsel %vm53, %v474, 0
  %484 = vmatprep.subr.mxu0 0.0
  %485 = vmatpush1.msra.mxu0 %v33
  %486 = vmatprep.subr.mxu0 0.0
  %487 = vmatpush1.msra.mxu0 0.0
  %488 = vmatprep.subr.mxu0 0.0
  %489 = vmatpush1.msra.mxu0 0.0
  %490 = vmatprep.subr.mxu0 0.0
  %491 = vmatpush1.msra.mxu0 0.0
  %492 = vmatprep.subr.mxu0 0.0
  %493 = vmatpush1.msra.mxu0 0.0
  %494 = vmatprep.subr.mxu0 0.0
  %495 = vmatpush1.msra.mxu0 0.0
  %496 = vmatprep.subr.mxu0 0.0
  %497 = vmatpush1.msra.mxu0 0.0
  %498 = vmatprep.subr.mxu0 0.0
  %499 = vmatpush1.msra.mxu0 0.0
  %500 = vmatprep.subr.mxu0 0.0
  %501 = vmatpush1.msra.mxu0 0.0
  %502 = vmatprep.subr.mxu0 0.0
  %503 = vmatpush1.msra.mxu0 0.0
  %504 = vmatprep.subr.mxu0 0.0
  %505 = vmatpush1.msra.mxu0 0.0
  %506 = vmatprep.subr.mxu0 0.0
  %507 = vmatpush1.msra.mxu0 0.0
  %508 = vmatprep.subr.mxu0 0.0
  %509 = vmatpush1.msra.mxu0 0.0
  %510 = vmatprep.subr.mxu0 0.0
  %511 = vmatpush1.msra.mxu0 0.0
  %512 = vmatprep.subr.mxu0 0.0
  %513 = vmatpush1.msra.mxu0 0.0
  %514 = vmatprep.subr.mxu0 0.0
  %515 = vmatpush1.msra.mxu0 0.0
  %516 = vmatprep.subr.mxu0 0.0
  %517 = vmatpush1.msra.mxu0 0.0
  %518 = vmatprep.subr.mxu0 0.0
  %519 = vmatpush1.msra.mxu0 0.0
  %520 = vmatprep.subr.mxu0 0.0
  %521 = vmatpush1.msra.mxu0 0.0
  %522 = vmatprep.subr.mxu0 0.0
  %523 = vmatpush1.msra.mxu0 0.0
  %524 = vmatprep.subr.mxu0 0.0
  %525 = vmatpush1.msra.mxu0 0.0
  %526 = vmatprep.subr.mxu0 0.0
  %527 = vmatpush1.msra.mxu0 0.0
  %528 = vmatprep.subr.mxu0 0.0
  %529 = vmatpush1.msra.mxu0 0.0
  %530 = vmatprep.subr.mxu0 0.0
  %531 = vmatpush1.msra.mxu0 0.0
  %532 = vmatprep.subr.mxu0 0.0
  %533 = vmatpush1.msra.mxu0 0.0
  %534 = vmatprep.subr.mxu0 0.0
  %535 = vmatpush1.msra.mxu0 0.0
  %536 = vmatprep.subr.mxu0 0.0
  %537 = vmatpush1.msra.mxu0 0.0
  %538 = vmatprep.subr.mxu0 0.0
  %539 = vmatpush1.msra.mxu0 0.0
  %540 = vmatprep.subr.mxu0 0.0
  %541 = vmatpush1.msra.mxu0 0.0
  %542 = vmatprep.subr.mxu0 0.0
  %543 = vmatpush1.msra.mxu0 0.0
  %544 = vmatprep.subr.mxu0 0.0
  %545 = vmatpush1.msra.mxu0 0.0
  %546 = vmatprep.subr.mxu0 0.0
  %547 = vmatpush1.msra.mxu0 0.0
  %548 = vmatprep.mubr.f32.mxu0 0.0
  %549 = vmatmul.mubr.f32.gmra.mrb[0].mxu0 %v479
  %v550 = vpop.f32.mrb[0].mxu0
  %v551 = vadd.f32 0.0, %v550
  %v552 = vpop.f32.mrb[0].mxu0
  %553 = vmatprep.mubr.f32.mxu0 0.0
  %554 = vmatmul.mubr.f32.gmra.mrb[0].mxu0 %v482
  %v555 = vpop.f32.mrb[0].mxu0
  %v556 = vadd.f32 0.0, %v555
  %v557 = vpop.f32.mrb[0].mxu0
  %558 = vdwg.mxu0
  %v560 = vsel %vm135, %v476, 0
  %v563 = vsel %vm135, %v477, 0
  %565 = vmatprep.subr.mxu0 0.0
  %566 = vmatpush1.msra.mxu0 %v551
  %567 = vmatprep.subr.mxu0 0.0
  %568 = vmatpush1.msra.mxu0 %v556
  %569 = vmatprep.subr.mxu0 0.0
  %570 = vmatpush1.msra.mxu0 0.0
  %571 = vmatprep.subr.mxu0 0.0
  %572 = vmatpush1.msra.mxu0 0.0
  %573 = vmatprep.subr.mxu0 0.0
  %574 = vmatpush1.msra.mxu0 0.0
  %575 = vmatprep.subr.mxu0 0.0
  %576 = vmatpush1.msra.mxu0 0.0
  %577 = vmatprep.subr.mxu0 0.0
  %578 = vmatpush1.msra.mxu0 0.0
  %579 = vmatprep.subr.mxu0 0.0
  %580 = vmatpush1.msra.mxu0 0.0
  %581 = vmatprep.subr.mxu0 0.0
  %582 = vmatpush1.msra.mxu0 0.0
  %583 = vmatprep.subr.mxu0 0.0
  %584 = vmatpush1.msra.mxu0 0.0
  %585 = vmatprep.subr.mxu0 0.0
  %586 = vmatpush1.msra.mxu0 0.0
  %587 = vmatprep.subr.mxu0 0.0
  %588 = vmatpush1.msra.mxu0 0.0
  %589 = vmatprep.subr.mxu0 0.0
  %590 = vmatpush1.msra.mxu0 0.0
  %591 = vmatprep.subr.mxu0 0.0
  %592 = vmatpush1.msra.mxu0 0.0
  %593 = vmatprep.subr.mxu0 0.0
  %594 = vmatpush1.msra.mxu0 0.0
  %595 = vmatprep.subr.mxu0 0.0
  %596 = vmatpush1.msra.mxu0 0.0
  %597 = vmatprep.subr.mxu0 0.0
  %598 = vmatpush1.msra.mxu0 0.0
  %599 = vmatprep.subr.mxu0 0.0
  %600 = vmatpush1.msra.mxu0 0.0
  %601 = vmatprep.subr.mxu0 0.0
  %602 = vmatpush1.msra.mxu0 0.0
  %603 = vmatprep.subr.mxu0 0.0
  %604 = vmatpush1.msra.mxu0 0.0
  %605 = vmatprep.subr.mxu0 0.0
  %606 = vmatpush1.msra.mxu0 0.0
  %607 = vmatprep.subr.mxu0 0.0
  %608 = vmatpush1.msra.mxu0 0.0
  %609 = vmatprep.subr.mxu0 0.0
  %610 = vmatpush1.msra.mxu0 0.0
  %611 = vmatprep.subr.mxu0 0.0
  %612 = vmatpush1.msra.mxu0 0.0
  %613 = vmatprep.subr.mxu0 0.0
  %614 = vmatpush1.msra.mxu0 0.0
  %615 = vmatprep.subr.mxu0 0.0
  %616 = vmatpush1.msra.mxu0 0.0
  %617 = vmatprep.subr.mxu0 0.0
  %618 = vmatpush1.msra.mxu0 0.0
  %619 = vmatprep.subr.mxu0 0.0
  %620 = vmatpush1.msra.mxu0 0.0
  %621 = vmatprep.subr.mxu0 0.0
  %622 = vmatpush1.msra.mxu0 0.0
  %623 = vmatprep.subr.mxu0 0.0
  %624 = vmatpush1.msra.mxu0 0.0
  %625 = vmatprep.subr.mxu0 0.0
  %626 = vmatpush1.msra.mxu0 0.0
  %627 = vmatprep.subr.mxu0 0.0
  %628 = vmatpush1.msra.mxu0 0.0
  %629 = vmatprep.mubr.f32.mxu0 0.0
  %630 = vmatmul.mubr.f32.gmra.mrb[0].mxu0 %v560
  %v631 = vpop.f32.mrb[0].mxu0
  %v632 = vadd.f32 0.0, %v631
  %v633 = vpop.f32.mrb[0].mxu0
  %634 = vmatprep.mubr.f32.mxu0 0.0
  %635 = vmatmul.mubr.f32.gmra.mrb[0].mxu0 %v563
  %v636 = vpop.f32.mrb[0].mxu0
  %v637 = vadd.f32 0.0, %v636
  %v638 = vpop.f32.mrb[0].mxu0
  %639 = vdwg.mxu0
  %640 = vmatprep.subr.mxu0 0.0
  %641 = vmatpush1.msra.mxu0 %v32
  %642 = vmatprep.subr.mxu0 0.0
  %643 = vmatpush1.msra.mxu0 0.0
  %644 = vmatprep.subr.mxu0 0.0
  %645 = vmatpush1.msra.mxu0 0.0
  %646 = vmatprep.subr.mxu0 0.0
  %647 = vmatpush1.msra.mxu0 0.0
  %648 = vmatprep.subr.mxu0 0.0
  %649 = vmatpush1.msra.mxu0 0.0
  %650 = vmatprep.subr.mxu0 0.0
  %651 = vmatpush1.msra.mxu0 0.0
  %652 = vmatprep.subr.mxu0 0.0
  %653 = vmatpush1.msra.mxu0 0.0
  %654 = vmatprep.subr.mxu0 0.0
  %655 = vmatpush1.msra.mxu0 0.0
  %656 = vmatprep.subr.mxu0 0.0
  %657 = vmatpush1.msra.mxu0 0.0
  %658 = vmatprep.subr.mxu0 0.0
  %659 = vmatpush1.msra.mxu0 0.0
  %660 = vmatprep.subr.mxu0 0.0
  %661 = vmatpush1.msra.mxu0 0.0
  %662 = vmatprep.subr.mxu0 0.0
  %663 = vmatpush1.msra.mxu0 0.0
  %664 = vmatprep.subr.mxu0 0.0
  %665 = vmatpush1.msra.mxu0 0.0
  %666 = vmatprep.subr.mxu0 0.0
  %667 = vmatpush1.msra.mxu0 0.0
  %668 = vmatprep.subr.mxu0 0.0
  %669 = vmatpush1.msra.mxu0 0.0
  %670 = vmatprep.subr.mxu0 0.0
  %671 = vmatpush1.msra.mxu0 0.0
  %672 = vmatprep.subr.mxu0 0.0
  %673 = vmatpush1.msra.mxu0 0.0
  %674 = vmatprep.subr.mxu0 0.0
  %675 = vmatpush1.msra.mxu0 0.0
  %676 = vmatprep.subr.mxu0 0.0
  %677 = vmatpush1.msra.mxu0 0.0
  %678 = vmatprep.subr.mxu0 0.0
  %679 = vmatpush1.msra.mxu0 0.0
  %680 = vmatprep.subr.mxu0 0.0
  %681 = vmatpush1.msra.mxu0 0.0
  %682 = vmatprep.subr.mxu0 0.0
  %683 = vmatpush1.msra.mxu0 0.0
  %684 = vmatprep.subr.mxu0 0.0
  %685 = vmatpush1.msra.mxu0 0.0
  %686 = vmatprep.subr.mxu0 0.0
  %687 = vmatpush1.msra.mxu0 0.0
  %688 = vmatprep.subr.mxu0 0.0
  %689 = vmatpush1.msra.mxu0 0.0
  %690 = vmatprep.subr.mxu0 0.0
  %691 = vmatpush1.msra.mxu0 0.0
  %692 = vmatprep.subr.mxu0 0.0
  %693 = vmatpush1.msra.mxu0 0.0
  %694 = vmatprep.subr.mxu0 0.0
  %695 = vmatpush1.msra.mxu0 0.0
  %696 = vmatprep.subr.mxu0 0.0
  %697 = vmatpush1.msra.mxu0 0.0
  %698 = vmatprep.subr.mxu0 0.0
  %699 = vmatpush1.msra.mxu0 0.0
  %700 = vmatprep.subr.mxu0 0.0
  %701 = vmatpush1.msra.mxu0 0.0
  %702 = vmatprep.subr.mxu0 0.0
  %703 = vmatpush1.msra.mxu0 0.0
  %704 = vmatprep.mubr.f32.mxu0 0.0
  %705 = vmatmul.mubr.f32.gmra.mrb[0].mxu0 %v479
  %v706 = vpop.f32.mrb[0].mxu0
  %v707 = vadd.f32 %v632, %v706
  %v708 = vpop.f32.mrb[0].mxu0
  %709 = vmatprep.mubr.f32.mxu0 0.0
  %710 = vmatmul.mubr.f32.gmra.mrb[0].mxu0 %v482
  %v711 = vpop.f32.mrb[0].mxu0
  %v712 = vadd.f32 %v637, %v711
  %v713 = vpop.f32.mrb[0].mxu0
  %714 = vdwg.mxu0
  %v716 = vsel %vm292, %v468, 0
  %v719 = vsel %vm292, %v469, 0
  %721 = vmatprep.subr.mxu0 0.0
  %722 = vmatpush1.msra.mxu0 %v34
  %723 = vmatprep.subr.mxu0 0.0
  %724 = vmatpush1.msra.mxu0 %v35
  %725 = vmatprep.subr.mxu0 0.0
  %726 = vmatpush1.msra.mxu0 %v36
  %727 = vmatprep.subr.mxu0 0.0
  %728 = vmatpush1.msra.mxu0 %v37
  %729 = vmatprep.subr.mxu0 0.0
  %730 = vmatpush1.msra.mxu0 0.0
  %731 = vmatprep.subr.mxu0 0.0
  %732 = vmatpush1.msra.mxu0 0.0
  %733 = vmatprep.subr.mxu0 0.0
  %734 = vmatpush1.msra.mxu0 0.0
  %735 = vmatprep.subr.mxu0 0.0
  %736 = vmatpush1.msra.mxu0 0.0
  %737 = vmatprep.subr.mxu0 0.0
  %738 = vmatpush1.msra.mxu0 0.0
  %739 = vmatprep.subr.mxu0 0.0
  %740 = vmatpush1.msra.mxu0 0.0
  %741 = vmatprep.subr.mxu0 0.0
  %742 = vmatpush1.msra.mxu0 0.0
  %743 = vmatprep.subr.mxu0 0.0
  %744 = vmatpush1.msra.mxu0 0.0
  %745 = vmatprep.subr.mxu0 0.0
  %746 = vmatpush1.msra.mxu0 0.0
  %747 = vmatprep.subr.mxu0 0.0
  %748 = vmatpush1.msra.mxu0 0.0
  %749 = vmatprep.subr.mxu0 0.0
  %750 = vmatpush1.msra.mxu0 0.0
  %751 = vmatprep.subr.mxu0 0.0
  %752 = vmatpush1.msra.mxu0 0.0
  %753 = vmatprep.subr.mxu0 0.0
  %754 = vmatpush1.msra.mxu0 0.0
  %755 = vmatprep.subr.mxu0 0.0
  %756 = vmatpush1.msra.mxu0 0.0
  %757 = vmatprep.subr.mxu0 0.0
  %758 = vmatpush1.msra.mxu0 0.0
  %759 = vmatprep.subr.mxu0 0.0
  %760 = vmatpush1.msra.mxu0 0.0
  %761 = vmatprep.subr.mxu0 0.0
  %762 = vmatpush1.msra.mxu0 0.0
  %763 = vmatprep.subr.mxu0 0.0
  %764 = vmatpush1.msra.mxu0 0.0
  %765 = vmatprep.subr.mxu0 0.0
  %766 = vmatpush1.msra.mxu0 0.0
  %767 = vmatprep.subr.mxu0 0.0
  %768 = vmatpush1.msra.mxu0 0.0
  %769 = vmatprep.subr.mxu0 0.0
  %770 = vmatpush1.msra.mxu0 0.0
  %771 = vmatprep.subr.mxu0 0.0
  %772 = vmatpush1.msra.mxu0 0.0
  %773 = vmatprep.subr.mxu0 0.0
  %774 = vmatpush1.msra.mxu0 0.0
  %775 = vmatprep.subr.mxu0 0.0
  %776 = vmatpush1.msra.mxu0 0.0
  %777 = vmatprep.subr.mxu0 0.0
  %778 = vmatpush1.msra.mxu0 0.0
  %779 = vmatprep.subr.mxu0 0.0
  %780 = vmatpush1.msra.mxu0 0.0
  %781 = vmatprep.subr.mxu0 0.0
  %782 = vmatpush1.msra.mxu0 0.0
  %783 = vmatprep.subr.mxu0 0.0
  %784 = vmatpush1.msra.mxu0 0.0
  %785 = vmatprep.mubr.f32.mxu0 0.0
  %786 = vmatmul.mubr.f32.gmra.mrb[0].mxu0 %v716
  %v787 = vpop.f32.mrb[0].mxu0
  %v788 = vadd.f32 0.0, %v787
  %v789 = vpop.f32.mrb[0].mxu0
  %790 = vmatprep.mubr.f32.mxu0 0.0
  %791 = vmatmul.mubr.f32.gmra.mrb[0].mxu0 %v719
  %v792 = vpop.f32.mrb[0].mxu0
  %v793 = vadd.f32 0.0, %v792
  %v794 = vpop.f32.mrb[0].mxu0
  %795 = vdwg.mxu0
  %v796 = vadd.f32 %v707, %v788
  %v797 = vadd.f32 %v712, %v793
  %v798 = vadd.f32 %v796, %v380
  %v799 = vadd.f32 %v797, %v380
  %v800 = vtanh.pop %v798
  %v801 = vtanh.pop %v799
  %v802 = vxor.u32 %v798, 2147483648
  %v803 = vxor.u32 %v799, 2147483648
  %v804 = vmul.f32 %v802, 1.442695
  %v805 = vpow.pop %v804
  %v806 = vmul.f32 %v803, 1.442695
  %v807 = vpow.pop %v806
  %v808 = vadd.f32 %v805, 1.0
  %v809 = vadd.f32 %v807, 1.0
  %v810 = vrcp.pop %v808
  %v811 = vmul.f32 1.0, %v810
  %v812 = vrcp.pop %v809
  %v813 = vmul.f32 1.0, %v812
  %v814 = vsel %vm44, %v800, %v811
  %v815 = vsel %vm44, %v801, %v813
  %v816 = vmul.f32 %v814, %v404
  %v817 = vmul.f32 %v815, %v404
  %v818 = vsel %vm292, %v816, 0.0
  %819 = vadd.xlane.f32.xlu0 %v818
  %v820 = vpop.xlane.xlu0 %819
  %v821 = vsel %vm292, %v817, 0.0
  %822 = vadd.xlane.f32.xlu0 %v821
  %v823 = vpop.xlane.xlu0 %822
  %v824 = vmul.f32 %v814, %v415
  %v825 = vmul.f32 %v815, %v415
  %828 = vrot.lane.b32.xlu0 %v824, 96
  %v829 = vpop.permute.xlu0 %828
  %830 = vrot.lane.b32.xlu0 %v825, 96
  %v831 = vpop.permute.xlu0 %830
  %v834 = vsel %vm292, %v829, 0.0
  %835 = vadd.xlane.f32.xlu0 %v834
  %v836 = vpop.xlane.xlu0 %835
  %v837 = vsel %vm292, %v831, 0.0
  %838 = vadd.xlane.f32.xlu0 %v837
  %v839 = vpop.xlane.xlu0 %838
  %v840 = vmul.f32 %v814, %v434
  %v841 = vmul.f32 %v815, %v434
  %844 = vrot.lane.b32.xlu0 %v840, 32
  %v845 = vpop.permute.xlu0 %844
  %846 = vrot.lane.b32.xlu0 %v841, 32
  %v847 = vpop.permute.xlu0 %846
  %v850 = vsel %vm292, %v845, 0.0
  %851 = vadd.xlane.f32.xlu0 %v850
  %v852 = vpop.xlane.xlu0 %851
  %v853 = vsel %vm292, %v847, 0.0
  %854 = vadd.xlane.f32.xlu0 %v853
  %v855 = vpop.xlane.xlu0 %854
  %v856 = vmul.f32 %v836, %v464
  %v857 = vmul.f32 %v839, %v465
  %v858 = vmul.f32 %v820, %v814
  %v859 = vmul.f32 %v823, %v815
  %862 = vrot.lane.b32.xlu0 %v858, 64
  %v863 = vpop.permute.xlu0 %862
  %864 = vrot.lane.b32.xlu0 %v859, 64
  %v865 = vpop.permute.xlu0 %864
  %v868 = vadd.f32 %v856, %v863
  %v869 = vadd.f32 %v857, %v865
  %v870 = vtanh.pop %v868
  %v871 = vtanh.pop %v869
  %v872 = vmul.f32 %v852, %v870
  %v873 = vmul.f32 %v855, %v871
  %s874 = scalar_lea.vmem %s9, 16
  %875 = vst.msk [vmem:[%s874] sm:$0xff] %vm292, %v872
  %876 = vst.msk [vmem:[%s874 + $0x8] sm:$0xff] %vm292, %v873
  %s877 = scalar_lea.vmem %s0, 32
  %v878 = vld [vmem:[%s877] sm:$0xff]
  %v879 = vld [vmem:[%s877 + $0x8] sm:$0xff]
  %s880 = scalar_lea.vmem %s1, 32
  %v881 = vld [vmem:[%s880] sm:$0xff]
  %v882 = vld [vmem:[%s880 + $0x8] sm:$0xff]
  %v884 = vsel %vm53, %v878, 0
  %v887 = vsel %vm53, %v879, 0
  %889 = vmatprep.subr.mxu0 0.0
  %890 = vmatpush1.msra.mxu0 %v33
  %891 = vmatprep.subr.mxu0 0.0
  %892 = vmatpush1.msra.mxu0 0.0
  %893 = vmatprep.subr.mxu0 0.0
  %894 = vmatpush1.msra.mxu0 0.0
  %895 = vmatprep.subr.mxu0 0.0
  %896 = vmatpush1.msra.mxu0 0.0
  %897 = vmatprep.subr.mxu0 0.0
  %898 = vmatpush1.msra.mxu0 0.0
  %899 = vmatprep.subr.mxu0 0.0
  %900 = vmatpush1.msra.mxu0 0.0
  %901 = vmatprep.subr.mxu0 0.0
  %902 = vmatpush1.msra.mxu0 0.0
  %903 = vmatprep.subr.mxu0 0.0
  %904 = vmatpush1.msra.mxu0 0.0
  %905 = vmatprep.subr.mxu0 0.0
  %906 = vmatpush1.msra.mxu0 0.0
  %907 = vmatprep.subr.mxu0 0.0
  %908 = vmatpush1.msra.mxu0 0.0
  %909 = vmatprep.subr.mxu0 0.0
  %910 = vmatpush1.msra.mxu0 0.0
  %911 = vmatprep.subr.mxu0 0.0
  %912 = vmatpush1.msra.mxu0 0.0
  %913 = vmatprep.subr.mxu0 0.0
  %914 = vmatpush1.msra.mxu0 0.0
  %915 = vmatprep.subr.mxu0 0.0
  %916 = vmatpush1.msra.mxu0 0.0
  %917 = vmatprep.subr.mxu0 0.0
  %918 = vmatpush1.msra.mxu0 0.0
  %919 = vmatprep.subr.mxu0 0.0
  %920 = vmatpush1.msra.mxu0 0.0
  %921 = vmatprep.subr.mxu0 0.0
  %922 = vmatpush1.msra.mxu0 0.0
  %923 = vmatprep.subr.mxu0 0.0
  %924 = vmatpush1.msra.mxu0 0.0
  %925 = vmatprep.subr.mxu0 0.0
  %926 = vmatpush1.msra.mxu0 0.0
  %927 = vmatprep.subr.mxu0 0.0
  %928 = vmatpush1.msra.mxu0 0.0
  %929 = vmatprep.subr.mxu0 0.0
  %930 = vmatpush1.msra.mxu0 0.0
  %931 = vmatprep.subr.mxu0 0.0
  %932 = vmatpush1.msra.mxu0 0.0
  %933 = vmatprep.subr.mxu0 0.0
  %934 = vmatpush1.msra.mxu0 0.0
  %935 = vmatprep.subr.mxu0 0.0
  %936 = vmatpush1.msra.mxu0 0.0
  %937 = vmatprep.subr.mxu0 0.0
  %938 = vmatpush1.msra.mxu0 0.0
  %939 = vmatprep.subr.mxu0 0.0
  %940 = vmatpush1.msra.mxu0 0.0
  %941 = vmatprep.subr.mxu0 0.0
  %942 = vmatpush1.msra.mxu0 0.0
  %943 = vmatprep.subr.mxu0 0.0
  %944 = vmatpush1.msra.mxu0 0.0
  %945 = vmatprep.subr.mxu0 0.0
  %946 = vmatpush1.msra.mxu0 0.0
  %947 = vmatprep.subr.mxu0 0.0
  %948 = vmatpush1.msra.mxu0 0.0
  %949 = vmatprep.subr.mxu0 0.0
  %950 = vmatpush1.msra.mxu0 0.0
  %951 = vmatprep.subr.mxu0 0.0
  %952 = vmatpush1.msra.mxu0 0.0
  %953 = vmatprep.mubr.f32.mxu0 0.0
  %954 = vmatmul.mubr.f32.gmra.mrb[0].mxu0 %v884
  %v955 = vpop.f32.mrb[0].mxu0
  %v956 = vadd.f32 0.0, %v955
  %v957 = vpop.f32.mrb[0].mxu0
  %958 = vmatprep.mubr.f32.mxu0 0.0
  %959 = vmatmul.mubr.f32.gmra.mrb[0].mxu0 %v887
  %v960 = vpop.f32.mrb[0].mxu0
  %v961 = vadd.f32 0.0, %v960
  %v962 = vpop.f32.mrb[0].mxu0
  %963 = vdwg.mxu0
  %v965 = vsel %vm135, %v881, 0
  %v968 = vsel %vm135, %v882, 0
  %970 = vmatprep.subr.mxu0 0.0
  %971 = vmatpush1.msra.mxu0 %v956
  %972 = vmatprep.subr.mxu0 0.0
  %973 = vmatpush1.msra.mxu0 %v961
  %974 = vmatprep.subr.mxu0 0.0
  %975 = vmatpush1.msra.mxu0 0.0
  %976 = vmatprep.subr.mxu0 0.0
  %977 = vmatpush1.msra.mxu0 0.0
  %978 = vmatprep.subr.mxu0 0.0
  %979 = vmatpush1.msra.mxu0 0.0
  %980 = vmatprep.subr.mxu0 0.0
  %981 = vmatpush1.msra.mxu0 0.0
  %982 = vmatprep.subr.mxu0 0.0
  %983 = vmatpush1.msra.mxu0 0.0
  %984 = vmatprep.subr.mxu0 0.0
  %985 = vmatpush1.msra.mxu0 0.0
  %986 = vmatprep.subr.mxu0 0.0
  %987 = vmatpush1.msra.mxu0 0.0
  %988 = vmatprep.subr.mxu0 0.0
  %989 = vmatpush1.msra.mxu0 0.0
  %990 = vmatprep.subr.mxu0 0.0
  %991 = vmatpush1.msra.mxu0 0.0
  %992 = vmatprep.subr.mxu0 0.0
  %993 = vmatpush1.msra.mxu0 0.0
  %994 = vmatprep.subr.mxu0 0.0
  %995 = vmatpush1.msra.mxu0 0.0
  %996 = vmatprep.subr.mxu0 0.0
  %997 = vmatpush1.msra.mxu0 0.0
  %998 = vmatprep.subr.mxu0 0.0
  %999 = vmatpush1.msra.mxu0 0.0
  %1000 = vmatprep.subr.mxu0 0.0
  %1001 = vmatpush1.msra.mxu0 0.0
  %1002 = vmatprep.subr.mxu0 0.0
  %1003 = vmatpush1.msra.mxu0 0.0
  %1004 = vmatprep.subr.mxu0 0.0
  %1005 = vmatpush1.msra.mxu0 0.0
  %1006 = vmatprep.subr.mxu0 0.0
  %1007 = vmatpush1.msra.mxu0 0.0
  %1008 = vmatprep.subr.mxu0 0.0
  %1009 = vmatpush1.msra.mxu0 0.0
  %1010 = vmatprep.subr.mxu0 0.0
  %1011 = vmatpush1.msra.mxu0 0.0
  %1012 = vmatprep.subr.mxu0 0.0
  %1013 = vmatpush1.msra.mxu0 0.0
  %1014 = vmatprep.subr.mxu0 0.0
  %1015 = vmatpush1.msra.mxu0 0.0
  %1016 = vmatprep.subr.mxu0 0.0
  %1017 = vmatpush1.msra.mxu0 0.0
  %1018 = vmatprep.subr.mxu0 0.0
  %1019 = vmatpush1.msra.mxu0 0.0
  %1020 = vmatprep.subr.mxu0 0.0
  %1021 = vmatpush1.msra.mxu0 0.0
  %1022 = vmatprep.subr.mxu0 0.0
  %1023 = vmatpush1.msra.mxu0 0.0
  %1024 = vmatprep.subr.mxu0 0.0
  %1025 = vmatpush1.msra.mxu0 0.0
  %1026 = vmatprep.subr.mxu0 0.0
  %1027 = vmatpush1.msra.mxu0 0.0
  %1028 = vmatprep.subr.mxu0 0.0
  %1029 = vmatpush1.msra.mxu0 0.0
  %1030 = vmatprep.subr.mxu0 0.0
  %1031 = vmatpush1.msra.mxu0 0.0
  %1032 = vmatprep.subr.mxu0 0.0
  %1033 = vmatpush1.msra.mxu0 0.0
  %1034 = vmatprep.mubr.f32.mxu0 0.0
  %1035 = vmatmul.mubr.f32.gmra.mrb[0].mxu0 %v965
  %v1036 = vpop.f32.mrb[0].mxu0
  %v1037 = vadd.f32 0.0, %v1036
  %v1038 = vpop.f32.mrb[0].mxu0
  %1039 = vmatprep.mubr.f32.mxu0 0.0
  %1040 = vmatmul.mubr.f32.gmra.mrb[0].mxu0 %v968
  %v1041 = vpop.f32.mrb[0].mxu0
  %v1042 = vadd.f32 0.0, %v1041
  %v1043 = vpop.f32.mrb[0].mxu0
  %1044 = vdwg.mxu0
  %1045 = vmatprep.subr.mxu0 0.0
  %1046 = vmatpush1.msra.mxu0 %v32
  %1047 = vmatprep.subr.mxu0 0.0
  %1048 = vmatpush1.msra.mxu0 0.0
  %1049 = vmatprep.subr.mxu0 0.0
  %1050 = vmatpush1.msra.mxu0 0.0
  %1051 = vmatprep.subr.mxu0 0.0
  %1052 = vmatpush1.msra.mxu0 0.0
  %1053 = vmatprep.subr.mxu0 0.0
  %1054 = vmatpush1.msra.mxu0 0.0
  %1055 = vmatprep.subr.mxu0 0.0
  %1056 = vmatpush1.msra.mxu0 0.0
  %1057 = vmatprep.subr.mxu0 0.0
  %1058 = vmatpush1.msra.mxu0 0.0
  %1059 = vmatprep.subr.mxu0 0.0
  %1060 = vmatpush1.msra.mxu0 0.0
  %1061 = vmatprep.subr.mxu0 0.0
  %1062 = vmatpush1.msra.mxu0 0.0
  %1063 = vmatprep.subr.mxu0 0.0
  %1064 = vmatpush1.msra.mxu0 0.0
  %1065 = vmatprep.subr.mxu0 0.0
  %1066 = vmatpush1.msra.mxu0 0.0
  %1067 = vmatprep.subr.mxu0 0.0
  %1068 = vmatpush1.msra.mxu0 0.0
  %1069 = vmatprep.subr.mxu0 0.0
  %1070 = vmatpush1.msra.mxu0 0.0
  %1071 = vmatprep.subr.mxu0 0.0
  %1072 = vmatpush1.msra.mxu0 0.0
  %1073 = vmatprep.subr.mxu0 0.0
  %1074 = vmatpush1.msra.mxu0 0.0
  %1075 = vmatprep.subr.mxu0 0.0
  %1076 = vmatpush1.msra.mxu0 0.0
  %1077 = vmatprep.subr.mxu0 0.0
  %1078 = vmatpush1.msra.mxu0 0.0
  %1079 = vmatprep.subr.mxu0 0.0
  %1080 = vmatpush1.msra.mxu0 0.0
  %1081 = vmatprep.subr.mxu0 0.0
  %1082 = vmatpush1.msra.mxu0 0.0
  %1083 = vmatprep.subr.mxu0 0.0
  %1084 = vmatpush1.msra.mxu0 0.0
  %1085 = vmatprep.subr.mxu0 0.0
  %1086 = vmatpush1.msra.mxu0 0.0
  %1087 = vmatprep.subr.mxu0 0.0
  %1088 = vmatpush1.msra.mxu0 0.0
  %1089 = vmatprep.subr.mxu0 0.0
  %1090 = vmatpush1.msra.mxu0 0.0
  %1091 = vmatprep.subr.mxu0 0.0
  %1092 = vmatpush1.msra.mxu0 0.0
  %1093 = vmatprep.subr.mxu0 0.0
  %1094 = vmatpush1.msra.mxu0 0.0
  %1095 = vmatprep.subr.mxu0 0.0
  %1096 = vmatpush1.msra.mxu0 0.0
  %1097 = vmatprep.subr.mxu0 0.0
  %1098 = vmatpush1.msra.mxu0 0.0
  %1099 = vmatprep.subr.mxu0 0.0
  %1100 = vmatpush1.msra.mxu0 0.0
  %1101 = vmatprep.subr.mxu0 0.0
  %1102 = vmatpush1.msra.mxu0 0.0
  %1103 = vmatprep.subr.mxu0 0.0
  %1104 = vmatpush1.msra.mxu0 0.0
  %1105 = vmatprep.subr.mxu0 0.0
  %1106 = vmatpush1.msra.mxu0 0.0
  %1107 = vmatprep.subr.mxu0 0.0
  %1108 = vmatpush1.msra.mxu0 0.0
  %1109 = vmatprep.mubr.f32.mxu0 0.0
  %1110 = vmatmul.mubr.f32.gmra.mrb[0].mxu0 %v884
  %v1111 = vpop.f32.mrb[0].mxu0
  %v1112 = vadd.f32 %v1037, %v1111
  %v1113 = vpop.f32.mrb[0].mxu0
  %1114 = vmatprep.mubr.f32.mxu0 0.0
  %1115 = vmatmul.mubr.f32.gmra.mrb[0].mxu0 %v887
  %v1116 = vpop.f32.mrb[0].mxu0
  %v1117 = vadd.f32 %v1042, %v1116
  %v1118 = vpop.f32.mrb[0].mxu0
  %1119 = vdwg.mxu0
  %v1121 = vsel %vm292, %v872, 0
  %v1124 = vsel %vm292, %v873, 0
  %1126 = vmatprep.subr.mxu0 0.0
  %1127 = vmatpush1.msra.mxu0 %v34
  %1128 = vmatprep.subr.mxu0 0.0
  %1129 = vmatpush1.msra.mxu0 %v35
  %1130 = vmatprep.subr.mxu0 0.0
  %1131 = vmatpush1.msra.mxu0 %v36
  %1132 = vmatprep.subr.mxu0 0.0
  %1133 = vmatpush1.msra.mxu0 %v37
  %1134 = vmatprep.subr.mxu0 0.0
  %1135 = vmatpush1.msra.mxu0 0.0
  %1136 = vmatprep.subr.mxu0 0.0
  %1137 = vmatpush1.msra.mxu0 0.0
  %1138 = vmatprep.subr.mxu0 0.0
  %1139 = vmatpush1.msra.mxu0 0.0
  %1140 = vmatprep.subr.mxu0 0.0
  %1141 = vmatpush1.msra.mxu0 0.0
  %1142 = vmatprep.subr.mxu0 0.0
  %1143 = vmatpush1.msra.mxu0 0.0
  %1144 = vmatprep.subr.mxu0 0.0
  %1145 = vmatpush1.msra.mxu0 0.0
  %1146 = vmatprep.subr.mxu0 0.0
  %1147 = vmatpush1.msra.mxu0 0.0
  %1148 = vmatprep.subr.mxu0 0.0
  %1149 = vmatpush1.msra.mxu0 0.0
  %1150 = vmatprep.subr.mxu0 0.0
  %1151 = vmatpush1.msra.mxu0 0.0
  %1152 = vmatprep.subr.mxu0 0.0
  %1153 = vmatpush1.msra.mxu0 0.0
  %1154 = vmatprep.subr.mxu0 0.0
  %1155 = vmatpush1.msra.mxu0 0.0
  %1156 = vmatprep.subr.mxu0 0.0
  %1157 = vmatpush1.msra.mxu0 0.0
  %1158 = vmatprep.subr.mxu0 0.0
  %1159 = vmatpush1.msra.mxu0 0.0
  %1160 = vmatprep.subr.mxu0 0.0
  %1161 = vmatpush1.msra.mxu0 0.0
  %1162 = vmatprep.subr.mxu0 0.0
  %1163 = vmatpush1.msra.mxu0 0.0
  %1164 = vmatprep.subr.mxu0 0.0
  %1165 = vmatpush1.msra.mxu0 0.0
  %1166 = vmatprep.subr.mxu0 0.0
  %1167 = vmatpush1.msra.mxu0 0.0
  %1168 = vmatprep.subr.mxu0 0.0
  %1169 = vmatpush1.msra.mxu0 0.0
  %1170 = vmatprep.subr.mxu0 0.0
  %1171 = vmatpush1.msra.mxu0 0.0
  %1172 = vmatprep.subr.mxu0 0.0
  %1173 = vmatpush1.msra.mxu0 0.0
  %1174 = vmatprep.subr.mxu0 0.0
  %1175 = vmatpush1.msra.mxu0 0.0
  %1176 = vmatprep.subr.mxu0 0.0
  %1177 = vmatpush1.msra.mxu0 0.0
  %1178 = vmatprep.subr.mxu0 0.0
  %1179 = vmatpush1.msra.mxu0 0.0
  %1180 = vmatprep.subr.mxu0 0.0
  %1181 = vmatpush1.msra.mxu0 0.0
  %1182 = vmatprep.subr.mxu0 0.0
  %1183 = vmatpush1.msra.mxu0 0.0
  %1184 = vmatprep.subr.mxu0 0.0
  %1185 = vmatpush1.msra.mxu0 0.0
  %1186 = vmatprep.subr.mxu0 0.0
  %1187 = vmatpush1.msra.mxu0 0.0
  %1188 = vmatprep.subr.mxu0 0.0
  %1189 = vmatpush1.msra.mxu0 0.0
  %1190 = vmatprep.mubr.f32.mxu0 0.0
  %1191 = vmatmul.mubr.f32.gmra.mrb[0].mxu0 %v1121
  %v1192 = vpop.f32.mrb[0].mxu0
  %v1193 = vadd.f32 0.0, %v1192
  %v1194 = vpop.f32.mrb[0].mxu0
  %1195 = vmatprep.mubr.f32.mxu0 0.0
  %1196 = vmatmul.mubr.f32.gmra.mrb[0].mxu0 %v1124
  %v1197 = vpop.f32.mrb[0].mxu0
  %v1198 = vadd.f32 0.0, %v1197
  %v1199 = vpop.f32.mrb[0].mxu0
  %1200 = vdwg.mxu0
  %v1201 = vadd.f32 %v1112, %v1193
  %v1202 = vadd.f32 %v1117, %v1198
  %v1203 = vadd.f32 %v1201, %v380
  %v1204 = vadd.f32 %v1202, %v380
  %v1205 = vtanh.pop %v1203
  %v1206 = vtanh.pop %v1204
  %v1207 = vxor.u32 %v1203, 2147483648
  %v1208 = vxor.u32 %v1204, 2147483648
  %v1209 = vmul.f32 %v1207, 1.442695
  %v1210 = vpow.pop %v1209
  %v1211 = vmul.f32 %v1208, 1.442695
  %v1212 = vpow.pop %v1211
  %v1213 = vadd.f32 %v1210, 1.0
  %v1214 = vadd.f32 %v1212, 1.0
  %v1215 = vrcp.pop %v1213
  %v1216 = vmul.f32 1.0, %v1215
  %v1217 = vrcp.pop %v1214
  %v1218 = vmul.f32 1.0, %v1217
  %v1219 = vsel %vm44, %v1205, %v1216
  %v1220 = vsel %vm44, %v1206, %v1218
  %v1221 = vmul.f32 %v1219, %v404
  %v1222 = vmul.f32 %v1220, %v404
  %v1223 = vsel %vm292, %v1221, 0.0
  %1224 = vadd.xlane.f32.xlu0 %v1223
  %v1225 = vpop.xlane.xlu0 %1224
  %v1226 = vsel %vm292, %v1222, 0.0
  %1227 = vadd.xlane.f32.xlu0 %v1226
  %v1228 = vpop.xlane.xlu0 %1227
  %v1229 = vmul.f32 %v1219, %v415
  %v1230 = vmul.f32 %v1220, %v415
  %1233 = vrot.lane.b32.xlu0 %v1229, 96
  %v1234 = vpop.permute.xlu0 %1233
  %1235 = vrot.lane.b32.xlu0 %v1230, 96
  %v1236 = vpop.permute.xlu0 %1235
  %v1239 = vsel %vm292, %v1234, 0.0
  %1240 = vadd.xlane.f32.xlu0 %v1239
  %v1241 = vpop.xlane.xlu0 %1240
  %v1242 = vsel %vm292, %v1236, 0.0
  %1243 = vadd.xlane.f32.xlu0 %v1242
  %v1244 = vpop.xlane.xlu0 %1243
  %v1245 = vmul.f32 %v1219, %v434
  %v1246 = vmul.f32 %v1220, %v434
  %1249 = vrot.lane.b32.xlu0 %v1245, 32
  %v1250 = vpop.permute.xlu0 %1249
  %1251 = vrot.lane.b32.xlu0 %v1246, 32
  %v1252 = vpop.permute.xlu0 %1251
  %v1255 = vsel %vm292, %v1250, 0.0
  %1256 = vadd.xlane.f32.xlu0 %v1255
  %v1257 = vpop.xlane.xlu0 %1256
  %v1258 = vsel %vm292, %v1252, 0.0
  %1259 = vadd.xlane.f32.xlu0 %v1258
  %v1260 = vpop.xlane.xlu0 %1259
  %v1261 = vmul.f32 %v1241, %v868
  %v1262 = vmul.f32 %v1244, %v869
  %v1263 = vmul.f32 %v1225, %v1219
  %v1264 = vmul.f32 %v1228, %v1220
  %1267 = vrot.lane.b32.xlu0 %v1263, 64
  %v1268 = vpop.permute.xlu0 %1267
  %1269 = vrot.lane.b32.xlu0 %v1264, 64
  %v1270 = vpop.permute.xlu0 %1269
  %v1273 = vadd.f32 %v1261, %v1268
  %v1274 = vadd.f32 %v1262, %v1270
  %v1275 = vtanh.pop %v1273
  %v1276 = vtanh.pop %v1274
  %v1277 = vmul.f32 %v1257, %v1275
  %v1278 = vmul.f32 %v1260, %v1276
  %s1279 = scalar_lea.vmem %s9, 32
  %1280 = vst.msk [vmem:[%s1279] sm:$0xff] %vm292, %v1277
  %1281 = vst.msk [vmem:[%s1279 + $0x8] sm:$0xff] %vm292, %v1278
  %s1282 = scalar_lea.vmem %s0, 48
  %v1283 = vld [vmem:[%s1282] sm:$0xff]
  %v1284 = vld [vmem:[%s1282 + $0x8] sm:$0xff]
  %s1285 = scalar_lea.vmem %s1, 48
  %v1286 = vld [vmem:[%s1285] sm:$0xff]
  %v1287 = vld [vmem:[%s1285 + $0x8] sm:$0xff]
  %v1289 = vsel %vm53, %v1283, 0
  %v1292 = vsel %vm53, %v1284, 0
  %1294 = vmatprep.subr.mxu0 0.0
  %1295 = vmatpush1.msra.mxu0 %v33
  %1296 = vmatprep.subr.mxu0 0.0
  %1297 = vmatpush1.msra.mxu0 0.0
  %1298 = vmatprep.subr.mxu0 0.0
  %1299 = vmatpush1.msra.mxu0 0.0
  %1300 = vmatprep.subr.mxu0 0.0
  %1301 = vmatpush1.msra.mxu0 0.0
  %1302 = vmatprep.subr.mxu0 0.0
  %1303 = vmatpush1.msra.mxu0 0.0
  %1304 = vmatprep.subr.mxu0 0.0
  %1305 = vmatpush1.msra.mxu0 0.0
  %1306 = vmatprep.subr.mxu0 0.0
  %1307 = vmatpush1.msra.mxu0 0.0
  %1308 = vmatprep.subr.mxu0 0.0
  %1309 = vmatpush1.msra.mxu0 0.0
  %1310 = vmatprep.subr.mxu0 0.0
  %1311 = vmatpush1.msra.mxu0 0.0
  %1312 = vmatprep.subr.mxu0 0.0
  %1313 = vmatpush1.msra.mxu0 0.0
  %1314 = vmatprep.subr.mxu0 0.0
  %1315 = vmatpush1.msra.mxu0 0.0
  %1316 = vmatprep.subr.mxu0 0.0
  %1317 = vmatpush1.msra.mxu0 0.0
  %1318 = vmatprep.subr.mxu0 0.0
  %1319 = vmatpush1.msra.mxu0 0.0
  %1320 = vmatprep.subr.mxu0 0.0
  %1321 = vmatpush1.msra.mxu0 0.0
  %1322 = vmatprep.subr.mxu0 0.0
  %1323 = vmatpush1.msra.mxu0 0.0
  %1324 = vmatprep.subr.mxu0 0.0
  %1325 = vmatpush1.msra.mxu0 0.0
  %1326 = vmatprep.subr.mxu0 0.0
  %1327 = vmatpush1.msra.mxu0 0.0
  %1328 = vmatprep.subr.mxu0 0.0
  %1329 = vmatpush1.msra.mxu0 0.0
  %1330 = vmatprep.subr.mxu0 0.0
  %1331 = vmatpush1.msra.mxu0 0.0
  %1332 = vmatprep.subr.mxu0 0.0
  %1333 = vmatpush1.msra.mxu0 0.0
  %1334 = vmatprep.subr.mxu0 0.0
  %1335 = vmatpush1.msra.mxu0 0.0
  %1336 = vmatprep.subr.mxu0 0.0
  %1337 = vmatpush1.msra.mxu0 0.0
  %1338 = vmatprep.subr.mxu0 0.0
  %1339 = vmatpush1.msra.mxu0 0.0
  %1340 = vmatprep.subr.mxu0 0.0
  %1341 = vmatpush1.msra.mxu0 0.0
  %1342 = vmatprep.subr.mxu0 0.0
  %1343 = vmatpush1.msra.mxu0 0.0
  %1344 = vmatprep.subr.mxu0 0.0
  %1345 = vmatpush1.msra.mxu0 0.0
  %1346 = vmatprep.subr.mxu0 0.0
  %1347 = vmatpush1.msra.mxu0 0.0
  %1348 = vmatprep.subr.mxu0 0.0
  %1349 = vmatpush1.msra.mxu0 0.0
  %1350 = vmatprep.subr.mxu0 0.0
  %1351 = vmatpush1.msra.mxu0 0.0
  %1352 = vmatprep.subr.mxu0 0.0
  %1353 = vmatpush1.msra.mxu0 0.0
  %1354 = vmatprep.subr.mxu0 0.0
  %1355 = vmatpush1.msra.mxu0 0.0
  %1356 = vmatprep.subr.mxu0 0.0
  %1357 = vmatpush1.msra.mxu0 0.0
  %1358 = vmatprep.mubr.f32.mxu0 0.0
  %1359 = vmatmul.mubr.f32.gmra.mrb[0].mxu0 %v1289
  %v1360 = vpop.f32.mrb[0].mxu0
  %v1361 = vadd.f32 0.0, %v1360
  %v1362 = vpop.f32.mrb[0].mxu0
  %1363 = vmatprep.mubr.f32.mxu0 0.0
  %1364 = vmatmul.mubr.f32.gmra.mrb[0].mxu0 %v1292
  %v1365 = vpop.f32.mrb[0].mxu0
  %v1366 = vadd.f32 0.0, %v1365
  %v1367 = vpop.f32.mrb[0].mxu0
  %1368 = vdwg.mxu0
  %v1370 = vsel %vm135, %v1286, 0
  %v1373 = vsel %vm135, %v1287, 0
  %1375 = vmatprep.subr.mxu0 0.0
  %1376 = vmatpush1.msra.mxu0 %v1361
  %1377 = vmatprep.subr.mxu0 0.0
  %1378 = vmatpush1.msra.mxu0 %v1366
  %1379 = vmatprep.subr.mxu0 0.0
  %1380 = vmatpush1.msra.mxu0 0.0
  %1381 = vmatprep.subr.mxu0 0.0
  %1382 = vmatpush1.msra.mxu0 0.0
  %1383 = vmatprep.subr.mxu0 0.0
  %1384 = vmatpush1.msra.mxu0 0.0
  %1385 = vmatprep.subr.mxu0 0.0
  %1386 = vmatpush1.msra.mxu0 0.0
  %1387 = vmatprep.subr.mxu0 0.0
  %1388 = vmatpush1.msra.mxu0 0.0
  %1389 = vmatprep.subr.mxu0 0.0
  %1390 = vmatpush1.msra.mxu0 0.0
  %1391 = vmatprep.subr.mxu0 0.0
  %1392 = vmatpush1.msra.mxu0 0.0
  %1393 = vmatprep.subr.mxu0 0.0
  %1394 = vmatpush1.msra.mxu0 0.0
  %1395 = vmatprep.subr.mxu0 0.0
  %1396 = vmatpush1.msra.mxu0 0.0
  %1397 = vmatprep.subr.mxu0 0.0
  %1398 = vmatpush1.msra.mxu0 0.0
  %1399 = vmatprep.subr.mxu0 0.0
  %1400 = vmatpush1.msra.mxu0 0.0
  %1401 = vmatprep.subr.mxu0 0.0
  %1402 = vmatpush1.msra.mxu0 0.0
  %1403 = vmatprep.subr.mxu0 0.0
  %1404 = vmatpush1.msra.mxu0 0.0
  %1405 = vmatprep.subr.mxu0 0.0
  %1406 = vmatpush1.msra.mxu0 0.0
  %1407 = vmatprep.subr.mxu0 0.0
  %1408 = vmatpush1.msra.mxu0 0.0
  %1409 = vmatprep.subr.mxu0 0.0
  %1410 = vmatpush1.msra.mxu0 0.0
  %1411 = vmatprep.subr.mxu0 0.0
  %1412 = vmatpush1.msra.mxu0 0.0
  %1413 = vmatprep.subr.mxu0 0.0
  %1414 = vmatpush1.msra.mxu0 0.0
  %1415 = vmatprep.subr.mxu0 0.0
  %1416 = vmatpush1.msra.mxu0 0.0
  %1417 = vmatprep.subr.mxu0 0.0
  %1418 = vmatpush1.msra.mxu0 0.0
  %1419 = vmatprep.subr.mxu0 0.0
  %1420 = vmatpush1.msra.mxu0 0.0
  %1421 = vmatprep.subr.mxu0 0.0
  %1422 = vmatpush1.msra.mxu0 0.0
  %1423 = vmatprep.subr.mxu0 0.0
  %1424 = vmatpush1.msra.mxu0 0.0
  %1425 = vmatprep.subr.mxu0 0.0
  %1426 = vmatpush1.msra.mxu0 0.0
  %1427 = vmatprep.subr.mxu0 0.0
  %1428 = vmatpush1.msra.mxu0 0.0
  %1429 = vmatprep.subr.mxu0 0.0
  %1430 = vmatpush1.msra.mxu0 0.0
  %1431 = vmatprep.subr.mxu0 0.0
  %1432 = vmatpush1.msra.mxu0 0.0
  %1433 = vmatprep.subr.mxu0 0.0
  %1434 = vmatpush1.msra.mxu0 0.0
  %1435 = vmatprep.subr.mxu0 0.0
  %1436 = vmatpush1.msra.mxu0 0.0
  %1437 = vmatprep.subr.mxu0 0.0
  %1438 = vmatpush1.msra.mxu0 0.0
  %1439 = vmatprep.mubr.f32.mxu0 0.0
  %1440 = vmatmul.mubr.f32.gmra.mrb[0].mxu0 %v1370
  %v1441 = vpop.f32.mrb[0].mxu0
  %v1442 = vadd.f32 0.0, %v1441
  %v1443 = vpop.f32.mrb[0].mxu0
  %1444 = vmatprep.mubr.f32.mxu0 0.0
  %1445 = vmatmul.mubr.f32.gmra.mrb[0].mxu0 %v1373
  %v1446 = vpop.f32.mrb[0].mxu0
  %v1447 = vadd.f32 0.0, %v1446
  %v1448 = vpop.f32.mrb[0].mxu0
  %1449 = vdwg.mxu0
  %1450 = vmatprep.subr.mxu0 0.0
  %1451 = vmatpush1.msra.mxu0 %v32
  %1452 = vmatprep.subr.mxu0 0.0
  %1453 = vmatpush1.msra.mxu0 0.0
  %1454 = vmatprep.subr.mxu0 0.0
  %1455 = vmatpush1.msra.mxu0 0.0
  %1456 = vmatprep.subr.mxu0 0.0
  %1457 = vmatpush1.msra.mxu0 0.0
  %1458 = vmatprep.subr.mxu0 0.0
  %1459 = vmatpush1.msra.mxu0 0.0
  %1460 = vmatprep.subr.mxu0 0.0
  %1461 = vmatpush1.msra.mxu0 0.0
  %1462 = vmatprep.subr.mxu0 0.0
  %1463 = vmatpush1.msra.mxu0 0.0
  %1464 = vmatprep.subr.mxu0 0.0
  %1465 = vmatpush1.msra.mxu0 0.0
  %1466 = vmatprep.subr.mxu0 0.0
  %1467 = vmatpush1.msra.mxu0 0.0
  %1468 = vmatprep.subr.mxu0 0.0
  %1469 = vmatpush1.msra.mxu0 0.0
  %1470 = vmatprep.subr.mxu0 0.0
  %1471 = vmatpush1.msra.mxu0 0.0
  %1472 = vmatprep.subr.mxu0 0.0
  %1473 = vmatpush1.msra.mxu0 0.0
  %1474 = vmatprep.subr.mxu0 0.0
  %1475 = vmatpush1.msra.mxu0 0.0
  %1476 = vmatprep.subr.mxu0 0.0
  %1477 = vmatpush1.msra.mxu0 0.0
  %1478 = vmatprep.subr.mxu0 0.0
  %1479 = vmatpush1.msra.mxu0 0.0
  %1480 = vmatprep.subr.mxu0 0.0
  %1481 = vmatpush1.msra.mxu0 0.0
  %1482 = vmatprep.subr.mxu0 0.0
  %1483 = vmatpush1.msra.mxu0 0.0
  %1484 = vmatprep.subr.mxu0 0.0
  %1485 = vmatpush1.msra.mxu0 0.0
  %1486 = vmatprep.subr.mxu0 0.0
  %1487 = vmatpush1.msra.mxu0 0.0
  %1488 = vmatprep.subr.mxu0 0.0
  %1489 = vmatpush1.msra.mxu0 0.0
  %1490 = vmatprep.subr.mxu0 0.0
  %1491 = vmatpush1.msra.mxu0 0.0
  %1492 = vmatprep.subr.mxu0 0.0
  %1493 = vmatpush1.msra.mxu0 0.0
  %1494 = vmatprep.subr.mxu0 0.0
  %1495 = vmatpush1.msra.mxu0 0.0
  %1496 = vmatprep.subr.mxu0 0.0
  %1497 = vmatpush1.msra.mxu0 0.0
  %1498 = vmatprep.subr.mxu0 0.0
  %1499 = vmatpush1.msra.mxu0 0.0
  %1500 = vmatprep.subr.mxu0 0.0
  %1501 = vmatpush1.msra.mxu0 0.0
  %1502 = vmatprep.subr.mxu0 0.0
  %1503 = vmatpush1.msra.mxu0 0.0
  %1504 = vmatprep.subr.mxu0 0.0
  %1505 = vmatpush1.msra.mxu0 0.0
  %1506 = vmatprep.subr.mxu0 0.0
  %1507 = vmatpush1.msra.mxu0 0.0
  %1508 = vmatprep.subr.mxu0 0.0
  %1509 = vmatpush1.msra.mxu0 0.0
  %1510 = vmatprep.subr.mxu0 0.0
  %1511 = vmatpush1.msra.mxu0 0.0
  %1512 = vmatprep.subr.mxu0 0.0
  %1513 = vmatpush1.msra.mxu0 0.0
  %1514 = vmatprep.mubr.f32.mxu0 0.0
  %1515 = vmatmul.mubr.f32.gmra.mrb[0].mxu0 %v1289
  %v1516 = vpop.f32.mrb[0].mxu0
  %v1517 = vadd.f32 %v1442, %v1516
  %v1518 = vpop.f32.mrb[0].mxu0
  %1519 = vmatprep.mubr.f32.mxu0 0.0
  %1520 = vmatmul.mubr.f32.gmra.mrb[0].mxu0 %v1292
  %v1521 = vpop.f32.mrb[0].mxu0
  %v1522 = vadd.f32 %v1447, %v1521
  %v1523 = vpop.f32.mrb[0].mxu0
  %1524 = vdwg.mxu0
  %v1526 = vsel %vm292, %v1277, 0
  %v1529 = vsel %vm292, %v1278, 0
  %1531 = vmatprep.subr.mxu0 0.0
  %1532 = vmatpush1.msra.mxu0 %v34
  %1533 = vmatprep.subr.mxu0 0.0
  %1534 = vmatpush1.msra.mxu0 %v35
  %1535 = vmatprep.subr.mxu0 0.0
  %1536 = vmatpush1.msra.mxu0 %v36
  %1537 = vmatprep.subr.mxu0 0.0
  %1538 = vmatpush1.msra.mxu0 %v37
  %1539 = vmatprep.subr.mxu0 0.0
  %1540 = vmatpush1.msra.mxu0 0.0
  %1541 = vmatprep.subr.mxu0 0.0
  %1542 = vmatpush1.msra.mxu0 0.0
  %1543 = vmatprep.subr.mxu0 0.0
  %1544 = vmatpush1.msra.mxu0 0.0
  %1545 = vmatprep.subr.mxu0 0.0
  %1546 = vmatpush1.msra.mxu0 0.0
  %1547 = vmatprep.subr.mxu0 0.0
  %1548 = vmatpush1.msra.mxu0 0.0
  %1549 = vmatprep.subr.mxu0 0.0
  %1550 = vmatpush1.msra.mxu0 0.0
  %1551 = vmatprep.subr.mxu0 0.0
  %1552 = vmatpush1.msra.mxu0 0.0
  %1553 = vmatprep.subr.mxu0 0.0
  %1554 = vmatpush1.msra.mxu0 0.0
  %1555 = vmatprep.subr.mxu0 0.0
  %1556 = vmatpush1.msra.mxu0 0.0
  %1557 = vmatprep.subr.mxu0 0.0
  %1558 = vmatpush1.msra.mxu0 0.0
  %1559 = vmatprep.subr.mxu0 0.0
  %1560 = vmatpush1.msra.mxu0 0.0
  %1561 = vmatprep.subr.mxu0 0.0
  %1562 = vmatpush1.msra.mxu0 0.0
  %1563 = vmatprep.subr.mxu0 0.0
  %1564 = vmatpush1.msra.mxu0 0.0
  %1565 = vmatprep.subr.mxu0 0.0
  %1566 = vmatpush1.msra.mxu0 0.0
  %1567 = vmatprep.subr.mxu0 0.0
  %1568 = vmatpush1.msra.mxu0 0.0
  %1569 = vmatprep.subr.mxu0 0.0
  %1570 = vmatpush1.msra.mxu0 0.0
  %1571 = vmatprep.subr.mxu0 0.0
  %1572 = vmatpush1.msra.mxu0 0.0
  %1573 = vmatprep.subr.mxu0 0.0
  %1574 = vmatpush1.msra.mxu0 0.0
  %1575 = vmatprep.subr.mxu0 0.0
  %1576 = vmatpush1.msra.mxu0 0.0
  %1577 = vmatprep.subr.mxu0 0.0
  %1578 = vmatpush1.msra.mxu0 0.0
  %1579 = vmatprep.subr.mxu0 0.0
  %1580 = vmatpush1.msra.mxu0 0.0
  %1581 = vmatprep.subr.mxu0 0.0
  %1582 = vmatpush1.msra.mxu0 0.0
  %1583 = vmatprep.subr.mxu0 0.0
  %1584 = vmatpush1.msra.mxu0 0.0
  %1585 = vmatprep.subr.mxu0 0.0
  %1586 = vmatpush1.msra.mxu0 0.0
  %1587 = vmatprep.subr.mxu0 0.0
  %1588 = vmatpush1.msra.mxu0 0.0
  %1589 = vmatprep.subr.mxu0 0.0
  %1590 = vmatpush1.msra.mxu0 0.0
  %1591 = vmatprep.subr.mxu0 0.0
  %1592 = vmatpush1.msra.mxu0 0.0
  %1593 = vmatprep.subr.mxu0 0.0
  %1594 = vmatpush1.msra.mxu0 0.0
  %1595 = vmatprep.mubr.f32.mxu0 0.0
  %1596 = vmatmul.mubr.f32.gmra.mrb[0].mxu0 %v1526
  %v1597 = vpop.f32.mrb[0].mxu0
  %v1598 = vadd.f32 0.0, %v1597
  %v1599 = vpop.f32.mrb[0].mxu0
  %1600 = vmatprep.mubr.f32.mxu0 0.0
  %1601 = vmatmul.mubr.f32.gmra.mrb[0].mxu0 %v1529
  %v1602 = vpop.f32.mrb[0].mxu0
  %v1603 = vadd.f32 0.0, %v1602
  %v1604 = vpop.f32.mrb[0].mxu0
  %1605 = vdwg.mxu0
  %v1606 = vadd.f32 %v1517, %v1598
  %v1607 = vadd.f32 %v1522, %v1603
  %v1608 = vadd.f32 %v1606, %v380
  %v1609 = vadd.f32 %v1607, %v380
  %v1610 = vtanh.pop %v1608
  %v1611 = vtanh.pop %v1609
  %v1612 = vxor.u32 %v1608, 2147483648
  %v1613 = vxor.u32 %v1609, 2147483648
  %v1614 = vmul.f32 %v1612, 1.442695
  %v1615 = vpow.pop %v1614
  %v1616 = vmul.f32 %v1613, 1.442695
  %v1617 = vpow.pop %v1616
  %v1618 = vadd.f32 %v1615, 1.0
  %v1619 = vadd.f32 %v1617, 1.0
  %v1620 = vrcp.pop %v1618
  %v1621 = vmul.f32 1.0, %v1620
  %v1622 = vrcp.pop %v1619
  %v1623 = vmul.f32 1.0, %v1622
  %v1624 = vsel %vm44, %v1610, %v1621
  %v1625 = vsel %vm44, %v1611, %v1623
  %v1626 = vmul.f32 %v1624, %v404
  %v1627 = vmul.f32 %v1625, %v404
  %v1628 = vsel %vm292, %v1626, 0.0
  %1629 = vadd.xlane.f32.xlu0 %v1628
  %v1630 = vpop.xlane.xlu0 %1629
  %v1631 = vsel %vm292, %v1627, 0.0
  %1632 = vadd.xlane.f32.xlu0 %v1631
  %v1633 = vpop.xlane.xlu0 %1632
  %v1634 = vmul.f32 %v1624, %v415
  %v1635 = vmul.f32 %v1625, %v415
  %1638 = vrot.lane.b32.xlu0 %v1634, 96
  %v1639 = vpop.permute.xlu0 %1638
  %1640 = vrot.lane.b32.xlu0 %v1635, 96
  %v1641 = vpop.permute.xlu0 %1640
  %v1644 = vsel %vm292, %v1639, 0.0
  %1645 = vadd.xlane.f32.xlu0 %v1644
  %v1646 = vpop.xlane.xlu0 %1645
  %v1647 = vsel %vm292, %v1641, 0.0
  %1648 = vadd.xlane.f32.xlu0 %v1647
  %v1649 = vpop.xlane.xlu0 %1648
  %v1650 = vmul.f32 %v1624, %v434
  %v1651 = vmul.f32 %v1625, %v434
  %1654 = vrot.lane.b32.xlu0 %v1650, 32
  %v1655 = vpop.permute.xlu0 %1654
  %1656 = vrot.lane.b32.xlu0 %v1651, 32
  %v1657 = vpop.permute.xlu0 %1656
  %v1660 = vsel %vm292, %v1655, 0.0
  %1661 = vadd.xlane.f32.xlu0 %v1660
  %v1662 = vpop.xlane.xlu0 %1661
  %v1663 = vsel %vm292, %v1657, 0.0
  %1664 = vadd.xlane.f32.xlu0 %v1663
  %v1665 = vpop.xlane.xlu0 %1664
  %v1666 = vmul.f32 %v1646, %v1273
  %v1667 = vmul.f32 %v1649, %v1274
  %v1668 = vmul.f32 %v1630, %v1624
  %v1669 = vmul.f32 %v1633, %v1625
  %1672 = vrot.lane.b32.xlu0 %v1668, 64
  %v1673 = vpop.permute.xlu0 %1672
  %1674 = vrot.lane.b32.xlu0 %v1669, 64
  %v1675 = vpop.permute.xlu0 %1674
  %v1678 = vadd.f32 %v1666, %v1673
  %v1679 = vadd.f32 %v1667, %v1675
  %v1680 = vtanh.pop %v1678
  %v1681 = vtanh.pop %v1679
  %v1682 = vmul.f32 %v1662, %v1680
  %v1683 = vmul.f32 %v1665, %v1681
  %s1684 = scalar_lea.vmem %s9, 48
  %1685 = vst.msk [vmem:[%s1684] sm:$0xff] %vm292, %v1682
  %1686 = vst.msk [vmem:[%s1684 + $0x8] sm:$0xff] %vm292, %v1683
  // Predicated region
  $region38: #{glstm_forward.1} parent=0 // pred_check
    _
  $region39: #{glstm_forward.1} parent=0 // pred_check_branch
    %1688 = sbr.rel (0) target = $region41
  $region40: #{glstm_forward.1} parent=0 // pred_region
    _
  $region41: #{glstm_forward.1} parent=0 // pred_fallthru
    _
  // Predicated region
  $region42: #{glstm_forward.1} parent=0 // pred_check
    _
  $region43: #{glstm_forward.1} parent=0 // pred_check_branch
    %1690 = sbr.rel (0) target = $region45
  $region44: #{glstm_forward.1} parent=0 // pred_region
    _
  $region45: #{glstm_forward.1} parent=0 // pred_fallthru
    _

</llo_original>
